<compile_context>
chip_gen: v7x
topology: tpu7x:2x2x1
jax: 0.10.0
libtpu: 0.0.40
codegen_flags: <defaults>
</compile_context>

<pallas_src>
import functools

import jax
import jax.numpy as jnp
from jax.experimental import pallas as pl
from jax.experimental.pallas import tpu as pltpu


def _round_up(x: int, m: int) -> int:
    return (x + m - 1) // m * m


def _default_tiles():
    """Chip-aware default (tile_n, tile_v)."""
    try:
        kind = jax.devices()[0].device_kind.lower()
    except Exception:  # pragma: no cover - best-effort heuristic
        kind = ""
    if "v5 lite" in kind or "v5e" in kind or "v5lite" in kind:
        return 256, 512      # v5e: ~240 FLOP/byte suffices; don't over-tile.
    if "v7" in kind:
        return 512, 512      # v7x: 64 MiB VMEM, 3.2 TB/s HBM.
    return 1024, 512         # v6e and other 128 MiB-VMEM parts.


def _lm_loss_kernel(x_ref, w_ref, b_ref, labels_ref, *rest,
                    tile_v: int, write_logits: bool):
    if write_logits:
        logits_ref, nll_ref, lse_ref, m_sc, l_sc, lab_sc = rest
    else:
        nll_ref, lse_ref, m_sc, l_sc, lab_sc = rest
        logits_ref = None

    j = pl.program_id(1)

    @pl.when(j == 0)
    def _init():
        m_sc[...] = jnp.full_like(m_sc, -jnp.inf)
        l_sc[...] = jnp.zeros_like(l_sc)
        lab_sc[...] = jnp.zeros_like(lab_sc)

    # MXU: bf16 x bf16 -> f32 accumulation; all softmax math stays f32
    # (v5e has no bf16 VPU/EUP path).  Padded vocab columns carry a -1e30
    # bias so they underflow to exactly 0 in exp() -- no masking passes.
    logits = jnp.dot(x_ref[...], w_ref[...],
                     preferred_element_type=jnp.float32)
    logits = logits + b_ref[...]

    if logits_ref is not None:
        logits_ref[...] = logits.astype(logits_ref.dtype)

    # Online (flash-style) log-sum-exp across vocab tiles.
    m_prev = m_sc[...]
    m_new = jnp.maximum(m_prev, jnp.max(logits, axis=-1, keepdims=True))
    alpha = jnp.exp(m_prev - m_new)
    l_sc[...] = alpha * l_sc[...] + jnp.sum(jnp.exp(logits - m_new),
                                            axis=-1, keepdims=True)
    m_sc[...] = m_new

    # Gather the logit at the (clamped) label with one masked sum on the raw
    # logits tile.  Lane iota is (1, tile_v); broadcasting against the per-row
    # relative label builds the hit mask without a full-tile iota + add.
    lane = jax.lax.broadcasted_iota(jnp.int32, (1, tile_v), 1)
    rel = jnp.maximum(labels_ref[...], 0) - j * tile_v        # (tile_n, 1)
    hit = lane == rel
    lab_sc[...] = lab_sc[...] + jnp.sum(jnp.where(hit, logits, 0.0),
                                        axis=-1, keepdims=True)

    @pl.when(j == pl.num_programs(1) - 1)
    def _finalize():
        lse = m_sc[...] + jnp.log(l_sc[...])                  # (tile_n, 1)
        nll_ref[...] = lse - lab_sc[...]                      # -log p(label)
        lse_ref[...] = lse


@functools.partial(
    jax.jit,
    static_argnames=("epsilon", "ignore_index", "vocab", "tile_n", "tile_v",
                     "return_logits"))
def _model_plus_loss(x_flat, w_p, b_p, rowsum_w, sum_b, labels_flat, *,
                     epsilon, ignore_index, vocab, tile_n, tile_v,
                     return_logits):
    n_tok, hidden = x_flat.shape
    v_pad = w_p.shape[1]

    tile_n = min(_round_up(tile_n, 8), _round_up(n_tok, 8))
    tile_v = int(tile_v)

    # ---- VMEM feasibility: cap at ~85% of physical VMEM (v7x is 64 MiB). ---
    try:
        vmem_cap = int(pltpu.get_tpu_info().vmem_capacity_bytes)
    except Exception:  # pragma: no cover - conservative fallback
        vmem_cap = 64 << 20
    vmem_budget = int(0.85 * vmem_cap)
    headroom = 8 << 20   # Mosaic internal scratch / f32 logits spill slack.

    def _blocks_bytes(tn, tv):
        bb = (2 * tn * hidden * 2        # x, double-buffered bf16
              + 2 * hidden * tv * 2      # w, double-buffered bf16
              + 2 * tv * 4               # bias
              + 2 * tn * 4               # labels
              + tn * tv * 4              # f32 logits intermediate
              + 3 * tn * 4               # accumulator scratch
              + 2 * 2 * tn * 4)          # stat outputs, double-buffered
        if return_logits:
            bb += 2 * tn * tv * 2        # logits writeback block
        return bb

    # Auto-shrink tiles if the requested configuration would not fit
    # (e.g. very large hidden on v7x's 64 MiB VMEM).
    while _blocks_bytes(tile_n, tile_v) + headroom > vmem_budget and tile_n > 256:
        tile_n = max(256, _round_up((tile_n + 1) // 2, 8))
    while _blocks_bytes(tile_n, tile_v) + headroom > vmem_budget and tile_v > 128:
        tile_v //= 2     # v_pad stays a multiple (tile_v halves evenly).

    n_pad = _round_up(n_tok, tile_n)
    grid = (n_pad // tile_n, v_pad // tile_v)

    vmem_limit = int(min(vmem_budget,
                         max(32 << 20,
                             _blocks_bytes(tile_n, tile_v) + 2 * headroom)))

    # Padded rows get ignore_index labels; they are sliced off after the call.
    x_p = jnp.zeros((n_pad, hidden), jnp.bfloat16)
    x_p = x_p.at[:n_tok].set(x_flat.astype(jnp.bfloat16))
    lbl_p = jnp.full((n_pad, 1), ignore_index, jnp.int32)
    lbl_p = lbl_p.at[:n_tok, 0].set(labels_flat.astype(jnp.int32))

    kernel = functools.partial(
        _lm_loss_kernel, tile_v=int(tile_v),
        write_logits=bool(return_logits))

    stat_spec = pl.BlockSpec((tile_n, 1), lambda i, j: (i, 0))
    stat_shape = jax.ShapeDtypeStruct((n_pad, 1), jnp.float32)
    out_specs = (stat_spec, stat_spec)
    out_shape = (stat_shape, stat_shape)
    if return_logits:
        out_specs = (pl.BlockSpec((tile_n, tile_v),
                                  lambda i, j: (i, j)),) + out_specs
        out_shape = (jax.ShapeDtypeStruct((n_pad, v_pad),
                                          jnp.bfloat16),) + out_shape

    cost = pl.CostEstimate(
        flops=2 * n_pad * hidden * v_pad,
        transcendentals=n_pad * v_pad,
        # x block index is (i, 0): constant across j, so it is DMA'd once.
        bytes_accessed=(n_pad * hidden * 2
                        + grid[0] * hidden * v_pad * 2
                        + (n_pad * v_pad * 2 if return_logits else 0)
                        + n_pad * 3 * 4))

    outs = pl.pallas_call(
        kernel,
        grid=grid,
        in_specs=[
            pl.BlockSpec((tile_n, hidden), lambda i, j: (i, 0)),   # x (bf16)
            pl.BlockSpec((hidden, tile_v), lambda i, j: (0, j)),   # w (bf16)
            pl.BlockSpec((1, tile_v), lambda i, j: (0, j)),        # bias (f32)
            pl.BlockSpec((tile_n, 1), lambda i, j: (i, 0)),        # labels
        ],
        out_specs=out_specs,
        out_shape=out_shape,
        scratch_shapes=[pltpu.VMEM((tile_n, 1), jnp.float32)] * 3,
        compiler_params=pltpu.CompilerParams(
            dimension_semantics=("parallel", "arbitrary"),
            vmem_limit_bytes=vmem_limit),
        cost_estimate=cost,
    )(x_p, w_p, b_p, lbl_p)

    if return_logits:
        logits_p, nll_tok, lse_tok = outs
        logits = logits_p[:n_tok, :vocab]
    else:
        nll_tok, lse_tok = outs
        logits = None

    # ---- Tiny cross-token epilogue in plain JAX (megacore-safe). -----------
    labels_i = labels_flat.astype(jnp.int32)
    pad = labels_i == ignore_index

    # sum_v(logits) = x . rowsum(W) + sum(b), computed algebraically (no
    # per-vocab-tile pass over the logits inside the kernel).  x is rounded
    # through bf16 to match the kernel's MXU operands.
    # NOTE: smoothed = V*lse - sum(logits) involves some f32 cancellation for
    # very large vocabs; acceptable for a term scaled by epsilon/V.
    x_bf = x_flat.astype(jnp.bfloat16).astype(jnp.float32)
    sum_logits = jnp.dot(x_bf, rowsum_w,
                         preferred_element_type=jnp.float32)[:, 0] + sum_b

    nll = jnp.where(pad, 0.0, nll_tok[:n_tok, 0])
    sm = jnp.where(pad, 0.0, float(vocab) * lse_tok[:n_tok, 0] - sum_logits)
    num_active = jnp.maximum(jnp.sum((~pad).astype(jnp.float32)), 1.0)
    nll_loss = jnp.sum(nll) / num_active
    smoothed_loss = jnp.sum(sm) / (num_active * float(vocab))
    loss = (1.0 - epsilon) * nll_loss + epsilon * smoothed_loss
    return loss, logits


class ModuleWithLoss:
    """JAX/Pallas analogue of optimum.onnxruntime ModuleWithLoss.

    Wraps a synthetic "original model" (linear LM head params) and a
    label-smoother (epsilon, ignore_index), computing forward + loss.
    The padded/bf16-cast weights, the -1e30 vocab-pad bias, the W row-sums and
    sum(b) are cached at construction time so no per-step re-pad/re-cast HBM
    traffic is incurred.
    """

    def __init__(self, model_params, args=None, label_smoother_epsilon=0.1,
                 ignore_index=-100, tile_n=None, tile_v=None):
        self._original_model = model_params     # dict: {"w": (H,V), "b": (1,V)}
        self.args = args
        self.epsilon = float(label_smoother_epsilon)
        self.ignore_index = int(ignore_index)

        dn, dv = _default_tiles()
        self.tile_n = int(tile_n) if tile_n is not None else dn
        tile_v = int(tile_v) if tile_v is not None else dv

        w = jnp.asarray(model_params["w"])
        b = jnp.asarray(model_params["b"])
        hidden, vocab = w.shape
        self.vocab = int(vocab)

        self.tile_v = min(_round_up(tile_v, 128), _round_up(vocab, 128))
        v_pad = _round_up(vocab, self.tile_v)

        w_bf = w.astype(jnp.bfloat16)
        self._w_p = jnp.zeros((hidden, v_pad), jnp.bfloat16)
        self._w_p = self._w_p.at[:, :vocab].set(w_bf)
        b_f = b.reshape(1, vocab).astype(jnp.float32)
        # Padded bias columns are -1e30 so they vanish inside exp() with no
        # explicit mask passes in the kernel.
        self._b_p = jnp.full((1, v_pad), -1e30, jnp.float32)
        self._b_p = self._b_p.at[:, :vocab].set(b_f)
        # For the algebraic sum_v(logits) used by the smoothed-loss term.
        self._rowsum_w = jnp.sum(w_bf.astype(jnp.float32), axis=1,
                                 keepdims=True)                  # (H, 1)
        self._sum_b = jnp.sum(b_f)

    def __call__(self, inputs, return_outputs):
        return self.compute_model_plus_loss_internal(
            self._original_model, inputs, return_outputs)

    def compute_model_plus_loss_internal(self, model, inputs, return_outputs):
        del model  # prepared parameter cache is used instead
        x = inputs["inputs_embeds"]              # (B, S, H)
        labels = inputs["labels"]                # (B, S) int
        b_, s_, h_ = x.shape
        loss, logits = _model_plus_loss(
            x.reshape(b_ * s_, h_), self._w_p, self._b_p, self._rowsum_w,
            self._sum_b, labels.reshape(b_ * s_).astype(jnp.int32),
            epsilon=self.epsilon, ignore_index=self.ignore_index,
            vocab=self.vocab, tile_n=self.tile_n, tile_v=self.tile_v,
            return_logits=bool(return_outputs))
        if return_outputs:
            return loss, logits.reshape(b_, s_, -1)
        return loss

    @property
    def module(self):
        return self._original_model

    @property
    def config(self):
        # TODO(synk): the wrapped synthetic model has no HF config object.
        return None


if __name__ == "__main__":
    # Small shapes that still exercise the full tiled path:
    #   tokens = 120 padded to 128 (2 token tiles of 64, with padded rows),
    #   vocab  = 1000 padded to 1024 (2 vocab tiles of 512, with masked cols).
    BATCH, SEQ, HIDDEN, VOCAB = 2, 60, 128, 1000

    key = jax.random.PRNGKey(0)
    k_x, k_w, k_b, k_lbl = jax.random.split(key, 4)

    # Deterministic synthetic parameters (the "original model").
    w = jax.random.normal(k_w, (HIDDEN, VOCAB), dtype=jnp.float32) * 0.02
    b = jax.random.normal(k_b, (1, VOCAB), dtype=jnp.float32) * 0.01
    model_params = {"w": w, "b": b}

    # Example inputs.
    x = jax.random.normal(k_x, (BATCH, SEQ, HIDDEN), dtype=jnp.float32)
    labels = jax.random.randint(k_lbl, (BATCH, SEQ), 0, VOCAB, dtype=jnp.int32)
    # Mark a few positions as ignored (-100), exercising the padding mask.
    labels = labels.at[0, 0].set(-100).at[1, SEQ - 1].set(-100)

    module = ModuleWithLoss(model_params, args=None,
                            label_smoother_epsilon=0.1, ignore_index=-100,
                            tile_n=64, tile_v=512)

    inputs = {"inputs_embeds": x, "labels": labels}
    loss, logits = module(inputs, return_outputs=True)
    loss_only = module(inputs, return_outputs=False)   # no logits writeback
    jax.block_until_ready((loss, logits, loss_only))

    # Pure-JAX reference (same bf16 matmul operands, f32 accumulation).
    x_flat = x.reshape(-1, HIDDEN)
    ref_logits = jnp.dot(x_flat.astype(jnp.bfloat16), w.astype(jnp.bfloat16),
                         preferred_element_type=jnp.float32) + b
    lp = jax.nn.log_softmax(ref_logits, axis=-1)
    lf = labels.reshape(-1)
    mask = lf == -100
    lc = jnp.maximum(lf, 0)
    nll = -jnp.take_along_axis(lp, lc[:, None], axis=-1)[:, 0]
    sm = -jnp.sum(lp, axis=-1)
    nll = jnp.where(mask, 0.0, nll)
    sm = jnp.where(mask, 0.0, sm)
    na = jnp.sum(~mask)
    ref_loss = 0.9 * (jnp.sum(nll) / na) + 0.1 * (jnp.sum(sm) / (na * VOCAB))

    assert jnp.allclose(loss, ref_loss, rtol=2e-3, atol=2e-3), (loss, ref_loss)
    assert jnp.allclose(loss_only, loss, rtol=1e-5, atol=1e-5), (loss_only, loss)
    assert jnp.allclose(logits.reshape(-1, VOCAB).astype(jnp.float32),
                        ref_logits, rtol=2e-2, atol=2e-2)

    print("KERNEL_OK")
</pallas_src>

<mosaic_0001>
module attributes {stable_mosaic.version = 11 : i64} {
  func.func @_lm_loss_kernel(%arg0: i32, %arg1: i32, %arg2: memref<64x128xbf16, #tpu.memory_space<vmem>>, %arg3: memref<128x512xbf16, #tpu.memory_space<vmem>>, %arg4: memref<1x512xf32, #tpu.memory_space<vmem>>, %arg5: memref<64x1xi32, #tpu.memory_space<vmem>>, %arg6: memref<64x512xbf16, #tpu.memory_space<vmem>>, %arg7: memref<64x1xf32, #tpu.memory_space<vmem>>, %arg8: memref<64x1xf32, #tpu.memory_space<vmem>>, %arg9: memref<64x1xf32, #tpu.memory_space<vmem>>, %arg10: memref<64x1xf32, #tpu.memory_space<vmem>>, %arg11: memref<64x1xf32, #tpu.memory_space<vmem>>) attributes {dimension_semantics = [#tpu.dimension_semantics<parallel>, #tpu.dimension_semantics<arbitrary>], iteration_bounds = array<i64: 2, 2>, scalar_prefetch = 0 : i64, scratch_operands = 3 : i64, tpu.core_type = #tpu.core_type<tc>, window_params = [{transform_indices = @transform_0, window_bounds = array<i64: 64, 128>}, {transform_indices = @transform_1, window_bounds = array<i64: 128, 512>}, {transform_indices = @transform_2, window_bounds = array<i64: 1, 512>}, {transform_indices = @transform_3, window_bounds = array<i64: 64, 1>}, {transform_indices = @transform_4, window_bounds = array<i64: 64, 512>}, {transform_indices = @transform_5, window_bounds = array<i64: 64, 1>}, {transform_indices = @transform_6, window_bounds = array<i64: 64, 1>}]} {
    %c0_i32 = arith.constant 0 : i32
    %0 = arith.cmpi eq, %arg1, %c0_i32 : i32
    %1 = arith.extui %0 : i1 to i32
    %c0_i32_0 = arith.constant 0 : i32
    %2 = arith.cmpi ne, %1, %c0_i32_0 : i32
    scf.if %2 {
      %cst_28 = arith.constant 0xFF800000 : f32
      %47 = vector.broadcast %cst_28 : f32 to vector<64x1xf32>
      %c0_29 = arith.constant 0 : index
      %c0_30 = arith.constant 0 : index
      %48 = vector.load %arg9[%c0_29, %c0_30] : memref<64x1xf32, #tpu.memory_space<vmem>>, vector<64x1xf32>
      tpu.vector_store %arg9[%c0_29, %c0_30], %47 {strides = array<i32>} : memref<64x1xf32, #tpu.memory_space<vmem>>, vector<64x1xf32>,
      %cst_31 = arith.constant 0.000000e+00 : f32
      %49 = vector.broadcast %cst_31 : f32 to vector<64x1xf32>
      %c0_32 = arith.constant 0 : index
      %c0_33 = arith.constant 0 : index
      %50 = vector.load %arg10[%c0_32, %c0_33] : memref<64x1xf32, #tpu.memory_space<vmem>>, vector<64x1xf32>
      tpu.vector_store %arg10[%c0_32, %c0_33], %49 {strides = array<i32>} : memref<64x1xf32, #tpu.memory_space<vmem>>, vector<64x1xf32>,
      %cst_34 = arith.constant 0.000000e+00 : f32
      %51 = vector.broadcast %cst_34 : f32 to vector<64x1xf32>
      %c0_35 = arith.constant 0 : index
      %c0_36 = arith.constant 0 : index
      %52 = vector.load %arg11[%c0_35, %c0_36] : memref<64x1xf32, #tpu.memory_space<vmem>>, vector<64x1xf32>
      tpu.vector_store %arg11[%c0_35, %c0_36], %51 {strides = array<i32>} : memref<64x1xf32, #tpu.memory_space<vmem>>, vector<64x1xf32>,
    } else {
    }
    %c0 = arith.constant 0 : index
    %c0_1 = arith.constant 0 : index
    %3 = vector.load %arg2[%c0, %c0_1] : memref<64x128xbf16, #tpu.memory_space<vmem>>, vector<64x128xbf16>
    %c0_2 = arith.constant 0 : index
    %c0_3 = arith.constant 0 : index
    %4 = vector.load %arg3[%c0_2, %c0_3] : memref<128x512xbf16, #tpu.memory_space<vmem>>, vector<128x512xbf16>
    %cst = arith.constant dense<0.000000e+00> : vector<64x512xf32>
    %5 = tpu.matmul %3, %4, %cst {dimension_numbers = #tpu.dot_dimension_numbers<[1], [0], [0], [1], [0, 0, 1, 1], [], []>} : vector<64x128xbf16>, vector<128x512xbf16>, vector<64x512xf32> -> vector<64x512xf32>
    %c0_4 = arith.constant 0 : index
    %c0_5 = arith.constant 0 : index
    %6 = vector.load %arg4[%c0_4, %c0_5] : memref<1x512xf32, #tpu.memory_space<vmem>>, vector<1x512xf32>
    %7 = vector.broadcast %6 : vector<1x512xf32> to vector<64x512xf32>
    %8 = arith.addf %5, %7 : vector<64x512xf32>
    %9 = arith.truncf %8 : vector<64x512xf32> to vector<64x512xbf16>
    %c0_6 = arith.constant 0 : index
    %c0_7 = arith.constant 0 : index
    %10 = vector.load %arg6[%c0_6, %c0_7] : memref<64x512xbf16, #tpu.memory_space<vmem>>, vector<64x512xbf16>
    tpu.vector_store %arg6[%c0_6, %c0_7], %9 {strides = array<i32>} : memref<64x512xbf16, #tpu.memory_space<vmem>>, vector<64x512xbf16>,
    %c0_8 = arith.constant 0 : index
    %c0_9 = arith.constant 0 : index
    %11 = vector.load %arg9[%c0_8, %c0_9] : memref<64x1xf32, #tpu.memory_space<vmem>>, vector<64x1xf32>
    %cst_10 = arith.constant dense<0xFF800000> : vector<64xf32>
    %12 = vector.multi_reduction <maximumf>, %8, %cst_10 [1] : vector<64x512xf32> to vector<64xf32>
    %13 = vector.shape_cast %12 : vector<64xf32> to vector<64x1xf32>
    %14 = arith.maximumf %11, %13 : vector<64x1xf32>
    %15 = arith.subf %11, %14 : vector<64x1xf32>
    %16 = math.exp %15 : vector<64x1xf32>
    %c0_11 = arith.constant 0 : index
    %c0_12 = arith.constant 0 : index
    %17 = vector.load %arg10[%c0_11, %c0_12] : memref<64x1xf32, #tpu.memory_space<vmem>>, vector<64x1xf32>
    %18 = arith.mulf %16, %17 : vector<64x1xf32>
    %19 = vector.broadcast %14 : vector<64x1xf32> to vector<64x512xf32>
    %20 = arith.subf %8, %19 : vector<64x512xf32>
    %21 = math.exp %20 : vector<64x512xf32>
    %cst_13 = arith.constant dense<0.000000e+00> : vector<64xf32>
    %22 = vector.multi_reduction <add>, %21, %cst_13 [1] : vector<64x512xf32> to vector<64xf32>
    %23 = vector.shape_cast %22 : vector<64xf32> to vector<64x1xf32>
    %24 = arith.addf %18, %23 : vector<64x1xf32>
    %c0_14 = arith.constant 0 : index
    %c0_15 = arith.constant 0 : index
    %25 = vector.load %arg10[%c0_14, %c0_15] : memref<64x1xf32, #tpu.memory_space<vmem>>, vector<64x1xf32>
    tpu.vector_store %arg10[%c0_14, %c0_15], %24 {strides = array<i32>} : memref<64x1xf32, #tpu.memory_space<vmem>>, vector<64x1xf32>,
    %c0_16 = arith.constant 0 : index
    %c0_17 = arith.constant 0 : index
    %26 = vector.load %arg9[%c0_16, %c0_17] : memref<64x1xf32, #tpu.memory_space<vmem>>, vector<64x1xf32>
    tpu.vector_store %arg9[%c0_16, %c0_17], %14 {strides = array<i32>} : memref<64x1xf32, #tpu.memory_space<vmem>>, vector<64x1xf32>,
    %27 = tpu.iota {dimensions = array<i32: 1>} : vector<1x512xi32>
    %c0_18 = arith.constant 0 : index
    %c0_19 = arith.constant 0 : index
    %28 = vector.load %arg5[%c0_18, %c0_19] : memref<64x1xi32, #tpu.memory_space<vmem>>, vector<64x1xi32>
    %c0_i32_20 = arith.constant 0 : i32
    %29 = vector.broadcast %c0_i32_20 : i32 to vector<64x1xi32>
    %30 = arith.maxsi %28, %29 : vector<64x1xi32>
    %c512_i32 = arith.constant 512 : i32
    %31 = arith.muli %arg1, %c512_i32 : i32
    %32 = vector.broadcast %31 : i32 to vector<64x1xi32>
    %33 = arith.subi %30, %32 : vector<64x1xi32>
    %34 = vector.broadcast %27 : vector<1x512xi32> to vector<64x512xi32>
    %35 = vector.broadcast %33 : vector<64x1xi32> to vector<64x512xi32>
    %36 = arith.cmpi eq, %34, %35 : vector<64x512xi32>
    %c0_21 = arith.constant 0 : index
    %c0_22 = arith.constant 0 : index
    %37 = vector.load %arg11[%c0_21, %c0_22] : memref<64x1xf32, #tpu.memory_space<vmem>>, vector<64x1xf32>
    %cst_23 = arith.constant 0.000000e+00 : f32
    %38 = vector.broadcast %cst_23 : f32 to vector<64x512xf32>
    %39 = arith.select %36, %8, %38 : vector<64x512xi1>, vector<64x512xf32>
    %cst_24 = arith.constant dense<0.000000e+00> : vector<64xf32>
    %40 = vector.multi_reduction <add>, %39, %cst_24 [1] : vector<64x512xf32> to vector<64xf32>
    %41 = vector.shape_cast %40 : vector<64xf32> to vector<64x1xf32>
    %42 = arith.addf %37, %41 : vector<64x1xf32>
    %c0_25 = arith.constant 0 : index
    %c0_26 = arith.constant 0 : index
    %43 = vector.load %arg11[%c0_25, %c0_26] : memref<64x1xf32, #tpu.memory_space<vmem>>, vector<64x1xf32>
    tpu.vector_store %arg11[%c0_25, %c0_26], %42 {strides = array<i32>} : memref<64x1xf32, #tpu.memory_space<vmem>>, vector<64x1xf32>,
    %c1_i32 = arith.constant 1 : i32
    %44 = arith.cmpi eq, %arg1, %c1_i32 : i32
    %45 = arith.extui %44 : i1 to i32
    %c0_i32_27 = arith.constant 0 : i32
    %46 = arith.cmpi ne, %45, %c0_i32_27 : i32
    scf.if %46 {
      %c0_28 = arith.constant 0 : index
      %c0_29 = arith.constant 0 : index
      %47 = vector.load %arg9[%c0_28, %c0_29] : memref<64x1xf32, #tpu.memory_space<vmem>>, vector<64x1xf32>
      %c0_30 = arith.constant 0 : index
      %c0_31 = arith.constant 0 : index
      %48 = vector.load %arg10[%c0_30, %c0_31] : memref<64x1xf32, #tpu.memory_space<vmem>>, vector<64x1xf32>
      %49 = math.log %48 : vector<64x1xf32>
      %50 = arith.addf %47, %49 : vector<64x1xf32>
      %c0_32 = arith.constant 0 : index
      %c0_33 = arith.constant 0 : index
      %51 = vector.load %arg11[%c0_32, %c0_33] : memref<64x1xf32, #tpu.memory_space<vmem>>, vector<64x1xf32>
      %52 = arith.subf %50, %51 : vector<64x1xf32>
      %c0_34 = arith.constant 0 : index
      %c0_35 = arith.constant 0 : index
      %53 = vector.load %arg7[%c0_34, %c0_35] : memref<64x1xf32, #tpu.memory_space<vmem>>, vector<64x1xf32>
      tpu.vector_store %arg7[%c0_34, %c0_35], %52 {strides = array<i32>} : memref<64x1xf32, #tpu.memory_space<vmem>>, vector<64x1xf32>,
      %c0_36 = arith.constant 0 : index
      %c0_37 = arith.constant 0 : index
      %54 = vector.load %arg8[%c0_36, %c0_37] : memref<64x1xf32, #tpu.memory_space<vmem>>, vector<64x1xf32>
      tpu.vector_store %arg8[%c0_36, %c0_37], %50 {strides = array<i32>} : memref<64x1xf32, #tpu.memory_space<vmem>>, vector<64x1xf32>,
    } else {
    }
    return
  }
  func.func @transform_0(%arg0: i32, %arg1: i32) -> (i32, i32) {
    %c0_i32 = arith.constant 0 : i32
    %c0_i32_0 = arith.constant 0 : i32
    return %arg0, %c0_i32 : i32, i32
  }
  func.func @transform_1(%arg0: i32, %arg1: i32) -> (i32, i32) {
    %c0_i32 = arith.constant 0 : i32
    %c0_i32_0 = arith.constant 0 : i32
    return %c0_i32, %arg1 : i32, i32
  }
  func.func @transform_2(%arg0: i32, %arg1: i32) -> (i32, i32) {
    %c0_i32 = arith.constant 0 : i32
    %c0_i32_0 = arith.constant 0 : i32
    return %c0_i32, %arg1 : i32, i32
  }
  func.func @transform_3(%arg0: i32, %arg1: i32) -> (i32, i32) {
    %c0_i32 = arith.constant 0 : i32
    %c0_i32_0 = arith.constant 0 : i32
    return %arg0, %c0_i32 : i32, i32
  }
  func.func @transform_4(%arg0: i32, %arg1: i32) -> (i32, i32) {
    %c0_i32 = arith.constant 0 : i32
    return %arg0, %arg1 : i32, i32
  }
  func.func @transform_5(%arg0: i32, %arg1: i32) -> (i32, i32) {
    %c0_i32 = arith.constant 0 : i32
    %c0_i32_0 = arith.constant 0 : i32
    return %arg0, %c0_i32 : i32, i32
  }
  func.func @transform_6(%arg0: i32, %arg1: i32) -> (i32, i32) {
    %c0_i32 = arith.constant 0 : i32
    %c0_i32_0 = arith.constant 0 : i32
    return %arg0, %c0_i32 : i32, i32
  }
}

</mosaic_0001>

<llo_original>
// kernel: _model_plus_loss.1
$region0: #{_model_plus_loss.1}
  #allocation0 [shape = 'u32[]', space=smem, size = 0x4, offset = 0x4, fixed_abs, tag = 'smem constant byte address 0x4 - core index']
  #allocation1 [shape = 'u32[144,128]{1,0:T(1,128)}', space=vmem, size = 0x12000, scoped, tag = 'internal scratch']
  #allocation2 [shape = 'f32[64,1]{1,0:T(8,128)}', space=vmem, size = 0x8000, scoped, tag = 'scratch operand']
  #allocation3 [shape = 'f32[64,1]{1,0:T(8,128)}', space=vmem, size = 0x8000, scoped, tag = 'scratch operand']
  #allocation4 [shape = 'f32[64,1]{1,0:T(8,128)}', space=vmem, size = 0x8000, scoped, tag = 'scratch operand']
  %s0 = inlined_call_operand.vmem [shape: bf16[128,128], index: 0, kind: input, shape index: {}]
  %s1 = inlined_call_operand.vmem [shape: bf16[128,1024], index: 1, kind: input, shape index: {}]
  %s2 = inlined_call_operand.vmem [shape: f32[1,1024], index: 2, kind: input, shape index: {}]
  %s3 = inlined_call_operand.vmem [shape: s32[128,1], index: 3, kind: input, shape index: {}]
  %s4 = inlined_call_operand.vmem [shape: bf16[128,1024], index: 4, kind: output, shape index: {0}]
  %s5 = inlined_call_operand.vmem [shape: f32[128,1], index: 5, kind: output, shape index: {1}]
  %s6 = inlined_call_operand.vmem [shape: f32[128,1], index: 6, kind: output, shape index: {2}]
  %7 = xla_tuple %s4, %s5, %s6
  %s8 = sld [smem:[#allocation0]]
  $region115: #{_model_plus_loss.1} parent=0
    _
  %s10 = ssub.s32 1, %s8
  %s11 = scalar_select 0, %s10, %s8
  $region1: #{_model_plus_loss.1} parent=0
    #allocation5 [shape = 'u8[262144]{0}', space=vmem, size = 0x40000, scoped, tag = 'input window, operand 1']
    #allocation6 [shape = 'u8[131072]{0}', space=vmem, size = 0x20000, scoped, tag = 'output window, operand 0']
    loop: start=0, step=1, limit=6
    $region2: #{_model_plus_loss.1} parent=1 // loop_pre_header
      _
    $region3: #{_model_plus_loss.1} parent=1 // loop_header
      %s13 = sphi 0, %s17
      %p14 = scmp.ge.s32.totalorder %s13, 6
      %s20 = sphi 0, %s32
      %s21 = sphi 0, %s28
      %s22 = sphi 0, %s20
      %s23 = sphi 0, %s21
      %s24 = sphi 0, %s22
      %s25 = sphi 0, %s23
      %s35 = sphi 0, %s37
      %s38 = sphi 0, %s35
      %s39 = sphi 0, %s38
      %s55 = sphi 0, %s39
      %s61 = sphi 0, %s63
      %s64 = sphi 0, %s61
      %s65 = sphi 0, %s64
      %s81 = sphi 0, %s65
      %s87 = sphi 0, %s89
      %s90 = sphi 0, %s87
      %s91 = sphi 0, %s90
      %s107 = sphi 0, %s91
      %s113 = sphi 0, %s115
      %s116 = sphi 0, %s113
      %s117 = sphi 0, %s116
      %s133 = sphi 0, %s117
      %s141 = sphi 0, %s143
      %s144 = sphi 0, %s141
      %s145 = sphi 0, %s144
      %s161 = sphi 0, %s145
      %s167 = sphi 0, %s169
      %s170 = sphi 0, %s167
      %s171 = sphi 0, %s170
      %s187 = sphi 0, %s171
      %s193 = sphi 0, %s195
      %s196 = sphi 0, %s193
      %s197 = sphi 0, %s196
      %s213 = sphi 0, %s197
    $region4: #{_model_plus_loss.1} parent=1 // loop_header_branch
      %16 = sbr.rel (%p14) target = $region8
    $region5: #{_model_plus_loss.1} parent=1 // loop_body
      %s18 = ssub.s32 %s13, 1
      %s19 = ssub.s32 %s13, 2
      %s26 = sadd.s32 1, %s21
      %p27 = scmp.ge.s32.totalorder %s26, 2
      %s28 = scalar_select %p27, 0, %s26
      %s29 = sadd.s32 1, %s20
      %s30 = scalar_select %p27, %s29, %s20
      %p31 = scmp.ge.s32.totalorder %s30, 2
      %s32 = scalar_select %p31, 0, %s30
      %s33 = ssub.s32 %s20, %s32
      %p34 = scmp.eq.s32.totalorder %s33, 0
      %s36 = sadd.s32 %s35, 1
      %s37 = scalar_select %p34, %s35, %s36
      %p40 = pneg %p34
      %p41 = scmp.eq.s32.totalorder %s13, 3
      %p42 = por %p40, %p41
      %p43 = scmp.ne.s32.totalorder %s35, %s38
      %p44 = scmp.eq.s32.totalorder %s13, 0
      %p45 = por %p43, %p44
      %p46 = scmp.ne.s32.totalorder %s35, %s38
      %p47 = scmp.eq.s32.totalorder %s18, 3
      %p48 = por %p46, %p47
      %p49 = scmp.ne.s32.totalorder %s38, %s39
      %p50 = scmp.eq.s32.totalorder %s18, 0
      %p51 = por %p49, %p50
      %p52 = scmp.ne.s32.totalorder %s38, %s39
      %p53 = scmp.eq.s32.totalorder %s19, 3
      %p54 = por %p52, %p53
      %p56 = scmp.ne.s32.totalorder %s39, %s55
      %p57 = scmp.eq.s32.totalorder %s19, 0
      %p58 = por %p56, %p57
      %s59 = ssub.s32 %s21, %s28
      %p60 = scmp.eq.s32.totalorder %s59, 0
      %s62 = sadd.s32 %s61, 1
      %s63 = scalar_select %p60, %s61, %s62
      %p66 = pneg %p60
      %p67 = scmp.eq.s32.totalorder %s13, 3
      %p68 = por %p66, %p67
      %p69 = scmp.ne.s32.totalorder %s61, %s64
      %p70 = scmp.eq.s32.totalorder %s13, 0
      %p71 = por %p69, %p70
      %p72 = scmp.ne.s32.totalorder %s61, %s64
      %p73 = scmp.eq.s32.totalorder %s18, 3
      %p74 = por %p72, %p73
      %p75 = scmp.ne.s32.totalorder %s64, %s65
      %p76 = scmp.eq.s32.totalorder %s18, 0
      %p77 = por %p75, %p76
      %p78 = scmp.ne.s32.totalorder %s64, %s65
      %p79 = scmp.eq.s32.totalorder %s19, 3
      %p80 = por %p78, %p79
      %p82 = scmp.ne.s32.totalorder %s65, %s81
      %p83 = scmp.eq.s32.totalorder %s19, 0
      %p84 = por %p82, %p83
      %s85 = ssub.s32 %s21, %s28
      %p86 = scmp.eq.s32.totalorder %s85, 0
      %s88 = sadd.s32 %s87, 1
      %s89 = scalar_select %p86, %s87, %s88
      %p92 = pneg %p86
      %p93 = scmp.eq.s32.totalorder %s13, 3
      %p94 = por %p92, %p93
      %p95 = scmp.ne.s32.totalorder %s87, %s90
      %p96 = scmp.eq.s32.totalorder %s13, 0
      %p97 = por %p95, %p96
      %p98 = scmp.ne.s32.totalorder %s87, %s90
      %p99 = scmp.eq.s32.totalorder %s18, 3
      %p100 = por %p98, %p99
      %p101 = scmp.ne.s32.totalorder %s90, %s91
      %p102 = scmp.eq.s32.totalorder %s18, 0
      %p103 = por %p101, %p102
      %p104 = scmp.ne.s32.totalorder %s90, %s91
      %p105 = scmp.eq.s32.totalorder %s19, 3
      %p106 = por %p104, %p105
      %p108 = scmp.ne.s32.totalorder %s91, %s107
      %p109 = scmp.eq.s32.totalorder %s19, 0
      %p110 = por %p108, %p109
      %s111 = ssub.s32 %s20, %s32
      %p112 = scmp.eq.s32.totalorder %s111, 0
      %s114 = sadd.s32 %s113, 1
      %s115 = scalar_select %p112, %s113, %s114
      %p118 = pneg %p112
      %p119 = scmp.eq.s32.totalorder %s13, 3
      %p120 = por %p118, %p119
      %p121 = scmp.ne.s32.totalorder %s113, %s116
      %p122 = scmp.eq.s32.totalorder %s13, 0
      %p123 = por %p121, %p122
      %p124 = scmp.ne.s32.totalorder %s113, %s116
      %p125 = scmp.eq.s32.totalorder %s18, 3
      %p126 = por %p124, %p125
      %p127 = scmp.ne.s32.totalorder %s116, %s117
      %p128 = scmp.eq.s32.totalorder %s18, 0
      %p129 = por %p127, %p128
      %p130 = scmp.ne.s32.totalorder %s116, %s117
      %p131 = scmp.eq.s32.totalorder %s19, 3
      %p132 = por %p130, %p131
      %p134 = scmp.ne.s32.totalorder %s117, %s133
      %p135 = scmp.eq.s32.totalorder %s19, 0
      %p136 = por %p134, %p135
      %s137 = ssub.s32 %s20, %s32
      %s138 = ssub.s32 %s21, %s28
      %s139 = sor.u32 %s137, %s138
      %p140 = scmp.eq.s32.totalorder %s139, 0
      %s142 = sadd.s32 %s141, 1
      %s143 = scalar_select %p140, %s141, %s142
      %p146 = pneg %p140
      %p147 = scmp.eq.s32.totalorder %s13, 3
      %p148 = por %p146, %p147
      %p149 = scmp.ne.s32.totalorder %s141, %s144
      %p150 = scmp.eq.s32.totalorder %s13, 0
      %p151 = por %p149, %p150
      %p152 = scmp.ne.s32.totalorder %s141, %s144
      %p153 = scmp.eq.s32.totalorder %s18, 3
      %p154 = por %p152, %p153
      %p155 = scmp.ne.s32.totalorder %s144, %s145
      %p156 = scmp.eq.s32.totalorder %s18, 0
      %p157 = por %p155, %p156
      %p158 = scmp.ne.s32.totalorder %s144, %s145
      %p159 = scmp.eq.s32.totalorder %s19, 3
      %p160 = por %p158, %p159
      %p162 = scmp.ne.s32.totalorder %s145, %s161
      %p163 = scmp.eq.s32.totalorder %s19, 0
      %p164 = por %p162, %p163
      %s165 = ssub.s32 %s20, %s32
      %p166 = scmp.eq.s32.totalorder %s165, 0
      %s168 = sadd.s32 %s167, 1
      %s169 = scalar_select %p166, %s167, %s168
      %p172 = pneg %p166
      %p173 = scmp.eq.s32.totalorder %s13, 3
      %p174 = por %p172, %p173
      %p175 = scmp.ne.s32.totalorder %s167, %s170
      %p176 = scmp.eq.s32.totalorder %s13, 0
      %p177 = por %p175, %p176
      %p178 = scmp.ne.s32.totalorder %s167, %s170
      %p179 = scmp.eq.s32.totalorder %s18, 3
      %p180 = por %p178, %p179
      %p181 = scmp.ne.s32.totalorder %s170, %s171
      %p182 = scmp.eq.s32.totalorder %s18, 0
      %p183 = por %p181, %p182
      %p184 = scmp.ne.s32.totalorder %s170, %s171
      %p185 = scmp.eq.s32.totalorder %s19, 3
      %p186 = por %p184, %p185
      %p188 = scmp.ne.s32.totalorder %s171, %s187
      %p189 = scmp.eq.s32.totalorder %s19, 0
      %p190 = por %p188, %p189
      %s191 = ssub.s32 %s20, %s32
      %p192 = scmp.eq.s32.totalorder %s191, 0
      %s194 = sadd.s32 %s193, 1
      %s195 = scalar_select %p192, %s193, %s194
      %p198 = pneg %p192
      %p199 = scmp.eq.s32.totalorder %s13, 3
      %p200 = por %p198, %p199
      %p201 = scmp.ne.s32.totalorder %s193, %s196
      %p202 = scmp.eq.s32.totalorder %s13, 0
      %p203 = por %p201, %p202
      %p204 = scmp.ne.s32.totalorder %s193, %s196
      %p205 = scmp.eq.s32.totalorder %s18, 3
      %p206 = por %p204, %p205
      %p207 = scmp.ne.s32.totalorder %s196, %s197
      %p208 = scmp.eq.s32.totalorder %s18, 0
      %p209 = por %p207, %p208
      %p210 = scmp.ne.s32.totalorder %s196, %s197
      %p211 = scmp.eq.s32.totalorder %s19, 3
      %p212 = por %p210, %p211
      %p214 = scmp.ne.s32.totalorder %s197, %s213
      %p215 = scmp.eq.s32.totalorder %s19, 0
      %p216 = por %p214, %p215
      %p217 = scmp.le.s32.totalorder 1, %s13
      %p218 = scmp.lt.s32.totalorder %s13, 5
      %p219 = pnand %p217, %p218
      %p220 = pneg %p219
      // Predicated region
      $region9: #{_model_plus_loss.1} parent=5 // pred_check
        _
      $region10: #{_model_plus_loss.1} parent=5 // pred_check_branch
        %222 = sbr.rel (%p219) target = $region12
      $region11: #{_model_plus_loss.1} parent=5 // pred_region
        %s223 = ssub.s32 %s13, 1
      $region12: #{_model_plus_loss.1} parent=5 // pred_fallthru
        _
      %p224 = scmp.lt.s32.totalorder %s13, 4
      // Predicated region
      $region13: #{_model_plus_loss.1} parent=5 // pred_check
        %p225 = pneg %p224
      $region14: #{_model_plus_loss.1} parent=5 // pred_check_branch
        %227 = sbr.rel (%p225) target = $region16
      $region15: #{_model_plus_loss.1} parent=5 // pred_region
        // Predicated region
        $region17: #{_model_plus_loss.1} parent=15 // pred_check
          %p228 = pneg %p45
        $region18: #{_model_plus_loss.1} parent=15 // pred_check_branch
          %230 = sbr.rel (%p228) target = $region20
        $region19: #{_model_plus_loss.1} parent=15 // pred_region
          %s231 = smul.u32 8, %s20
          %p232 = scmp.lt.s32.totalorder %s231, 15
          %s233 = scalar_select %p232, %s231, 15
          %s234 = smul.addr %s233, 4
          %s235 = scalar_lea.vmem %s0, %s234
          %s236 = smul.u32 8, %s20
        $region20: #{_model_plus_loss.1} parent=15 // pred_fallthru
          _
        // Predicated region
        $region21: #{_model_plus_loss.1} parent=15 // pred_check
          %p237 = pneg %p71
        $region22: #{_model_plus_loss.1} parent=15 // pred_check_branch
          %239 = sbr.rel (%p237) target = $region24
        $region23: #{_model_plus_loss.1} parent=15 // pred_region
          %s240 = sand.u32 %s61, 1
          %s241 = sand.u32 %s61, 1
          %s242 = smul.addr %s241, 256
          %s243 = scalar_lea.vmem [#allocation5], %s242
          %s244 = smul.u32 4, %s21
          %s245 = smul.addr %s244, 4
          %s246 = scalar_lea.vmem %s1, %s245
          // Predicated region
          $region25: #{_model_plus_loss.1} parent=23 // pred_check
            _
          $region26: #{_model_plus_loss.1} parent=23 // pred_check_branch
            %248 = sbr.rel (0) target = $region28
          $region27: #{_model_plus_loss.1} parent=23 // pred_region
            // Predicated region
            $region29: #{_model_plus_loss.1} parent=27 // pred_check
              _
            $region30: #{_model_plus_loss.1} parent=27 // pred_check_branch
              %250 = sbr.rel (0) target = $region32
            $region31: #{_model_plus_loss.1} parent=27 // pred_region
              loop: start=0, step=1, limit=1
              $region33: #{_model_plus_loss.1} parent=31 // loop_pre_header
                _
              $region34: #{_model_plus_loss.1} parent=31 // loop_header
                %s252 = sphi 0, %s256
                %p253 = scmp.ge.s32.totalorder %s252, 1
                %s257 = sphi %s246, %s246
                %s258 = sphi %s243, %s243
              $region35: #{_model_plus_loss.1} parent=31 // loop_header_branch
                %255 = sbr.rel (%p253) target = $region39
              $region36: #{_model_plus_loss.1} parent=31 // loop_body
                %v259 = vld [vmem:[%s257] sm:$0xff]
                %260 = vst [vmem:[%s258] sm:$0xff] %v259
                %v261 = vld [vmem:[%s257 + $0x8] sm:$0xff]
                %262 = vst [vmem:[%s258 + $0x8] sm:$0xff] %v261
                %v263 = vld [vmem:[%s257 + $0x20] sm:$0xff]
                %264 = vst [vmem:[%s258 + $0x10] sm:$0xff] %v263
                %v265 = vld [vmem:[%s257 + $0x28] sm:$0xff]
                %266 = vst [vmem:[%s258 + $0x18] sm:$0xff] %v265
                %v267 = vld [vmem:[%s257 + $0x40] sm:$0xff]
                %268 = vst [vmem:[%s258 + $0x20] sm:$0xff] %v267
                %v269 = vld [vmem:[%s257 + $0x48] sm:$0xff]
                %270 = vst [vmem:[%s258 + $0x28] sm:$0xff] %v269
                %v271 = vld [vmem:[%s257 + $0x60] sm:$0xff]
                %272 = vst [vmem:[%s258 + $0x30] sm:$0xff] %v271
                %v273 = vld [vmem:[%s257 + $0x68] sm:$0xff]
                %274 = vst [vmem:[%s258 + $0x38] sm:$0xff] %v273
                %v275 = vld [vmem:[%s257 + $0x80] sm:$0xff]
                %276 = vst [vmem:[%s258 + $0x40] sm:$0xff] %v275
                %v277 = vld [vmem:[%s257 + $0x88] sm:$0xff]
                %278 = vst [vmem:[%s258 + $0x48] sm:$0xff] %v277
                %v279 = vld [vmem:[%s257 + $0xa0] sm:$0xff]
                %280 = vst [vmem:[%s258 + $0x50] sm:$0xff] %v279
                %v281 = vld [vmem:[%s257 + $0xa8] sm:$0xff]
                %282 = vst [vmem:[%s258 + $0x58] sm:$0xff] %v281
                %v283 = vld [vmem:[%s257 + $0xc0] sm:$0xff]
                %284 = vst [vmem:[%s258 + $0x60] sm:$0xff] %v283
                %v285 = vld [vmem:[%s257 + $0xc8] sm:$0xff]
                %286 = vst [vmem:[%s258 + $0x68] sm:$0xff] %v285
                %v287 = vld [vmem:[%s257 + $0xe0] sm:$0xff]
                %288 = vst [vmem:[%s258 + $0x70] sm:$0xff] %v287
                %v289 = vld [vmem:[%s257 + $0xe8] sm:$0xff]
                %290 = vst [vmem:[%s258 + $0x78] sm:$0xff] %v289
                %v291 = vld [vmem:[%s257 + $0x100] sm:$0xff]
                %292 = vst [vmem:[%s258 + $0x80] sm:$0xff] %v291
                %v293 = vld [vmem:[%s257 + $0x108] sm:$0xff]
                %294 = vst [vmem:[%s258 + $0x88] sm:$0xff] %v293
                %v295 = vld [vmem:[%s257 + $0x120] sm:$0xff]
                %296 = vst [vmem:[%s258 + $0x90] sm:$0xff] %v295
                %v297 = vld [vmem:[%s257 + $0x128] sm:$0xff]
                %298 = vst [vmem:[%s258 + $0x98] sm:$0xff] %v297
                %v299 = vld [vmem:[%s257 + $0x140] sm:$0xff]
                %300 = vst [vmem:[%s258 + $0xa0] sm:$0xff] %v299
                %v301 = vld [vmem:[%s257 + $0x148] sm:$0xff]
                %302 = vst [vmem:[%s258 + $0xa8] sm:$0xff] %v301
                %v303 = vld [vmem:[%s257 + $0x160] sm:$0xff]
                %304 = vst [vmem:[%s258 + $0xb0] sm:$0xff] %v303
                %v305 = vld [vmem:[%s257 + $0x168] sm:$0xff]
                %306 = vst [vmem:[%s258 + $0xb8] sm:$0xff] %v305
                %v307 = vld [vmem:[%s257 + $0x180] sm:$0xff]
                %308 = vst [vmem:[%s258 + $0xc0] sm:$0xff] %v307
                %v309 = vld [vmem:[%s257 + $0x188] sm:$0xff]
                %310 = vst [vmem:[%s258 + $0xc8] sm:$0xff] %v309
                %v311 = vld [vmem:[%s257 + $0x1a0] sm:$0xff]
                %312 = vst [vmem:[%s258 + $0xd0] sm:$0xff] %v311
                %v313 = vld [vmem:[%s257 + $0x1a8] sm:$0xff]
                %314 = vst [vmem:[%s258 + $0xd8] sm:$0xff] %v313
                %v315 = vld [vmem:[%s257 + $0x1c0] sm:$0xff]
                %316 = vst [vmem:[%s258 + $0xe0] sm:$0xff] %v315
                %v317 = vld [vmem:[%s257 + $0x1c8] sm:$0xff]
                %318 = vst [vmem:[%s258 + $0xe8] sm:$0xff] %v317
                %v319 = vld [vmem:[%s257 + $0x1e0] sm:$0xff]
                %320 = vst [vmem:[%s258 + $0xf0] sm:$0xff] %v319
                %v321 = vld [vmem:[%s257 + $0x1e8] sm:$0xff]
                %322 = vst [vmem:[%s258 + $0xf8] sm:$0xff] %v321
              $region37: #{_model_plus_loss.1} parent=31 // loop_footer
                %s256 = sadd.s32 1, %s252
              $region38: #{_model_plus_loss.1} parent=31 // loop_footer_branch
                %251 = sbr.rel target = $region34
              $region39: #{_model_plus_loss.1} parent=31 // loop_exit
                _
            $region32: #{_model_plus_loss.1} parent=27 // pred_fallthru
              _
            // Predicated region
            $region40: #{_model_plus_loss.1} parent=27 // pred_check
              _
            $region41: #{_model_plus_loss.1} parent=27 // pred_check_branch
              %324 = sbr.rel target = $region43
            $region42: #{_model_plus_loss.1} parent=27 // pred_region
              _
            $region43: #{_model_plus_loss.1} parent=27 // pred_fallthru
              _
          $region28: #{_model_plus_loss.1} parent=23 // pred_fallthru
            _
          %325 = vnop
        $region24: #{_model_plus_loss.1} parent=15 // pred_fallthru
          _
        // Predicated region
        $region44: #{_model_plus_loss.1} parent=15 // pred_check
          %p326 = pneg %p97
        $region45: #{_model_plus_loss.1} parent=15 // pred_check_branch
          %328 = sbr.rel (%p326) target = $region47
        $region46: #{_model_plus_loss.1} parent=15 // pred_region
          %s329 = smul.u32 4, %s21
          %p330 = scmp.lt.s32.totalorder %s329, 7
          %s331 = scalar_select %p330, %s329, 7
          %s332 = scalar_lea.vmem %s2, %s331
          %s333 = smul.u32 4, %s21
        $region47: #{_model_plus_loss.1} parent=15 // pred_fallthru
          _
        // Predicated region
        $region48: #{_model_plus_loss.1} parent=15 // pred_check
          %p334 = pneg %p123
        $region49: #{_model_plus_loss.1} parent=15 // pred_check_branch
          %336 = sbr.rel (%p334) target = $region51
        $region50: #{_model_plus_loss.1} parent=15 // pred_region
          %s337 = smul.u32 8, %s20
          %p338 = scmp.lt.s32.totalorder %s337, 15
          %s339 = scalar_select %p338, %s337, 15
          %s340 = smul.addr %s339, 8
          %s341 = scalar_lea.vmem %s3, %s340
          %s342 = smul.u32 8, %s20
        $region51: #{_model_plus_loss.1} parent=15 // pred_fallthru
          _
      $region16: #{_model_plus_loss.1} parent=5 // pred_fallthru
        _
      %p343 = scmp.le.s32.totalorder 1, %s13
      %p344 = scmp.lt.s32.totalorder %s13, 5
      %p345 = pnand %p343, %p344
      %p346 = pneg %p345
      // Predicated region
      $region52: #{_model_plus_loss.1} parent=5 // pred_check
        _
      $region53: #{_model_plus_loss.1} parent=5 // pred_check_branch
        %348 = sbr.rel (%p345) target = $region55
      $region54: #{_model_plus_loss.1} parent=5 // pred_region
        %s349 = ssub.s32 %s13, 1
        %s350 = sand.u32 %s64, 1
        %s351 = sand.u32 %s64, 1
        %s352 = smul.addr %s351, 256
        %s353 = scalar_lea.vmem [#allocation5], %s352
        // Predicated region
        $region56: #{_model_plus_loss.1} parent=54 // pred_check
          %p354 = pneg %p77
        $region57: #{_model_plus_loss.1} parent=54 // pred_check_branch
          %356 = sbr.rel (%p354) target = $region59
        $region58: #{_model_plus_loss.1} parent=54 // pred_region
          _
        $region59: #{_model_plus_loss.1} parent=54 // pred_fallthru
          _
        %s357 = smul.u32 8, %s22
        %p358 = scmp.lt.s32.totalorder %s357, 15
        %s359 = scalar_select %p358, %s357, 15
        %s360 = smul.addr %s359, 4
        %s361 = scalar_lea.vmem %s0, %s360
        %p362 = pneg %p51
        %p363 = pneg %p48
        %s364 = sand.u32 %s64, 1
        %s365 = sand.u32 %s64, 1
        %s366 = smul.addr %s365, 256
        %s367 = scalar_lea.vmem [#allocation5], %s366
        %p368 = pneg %p77
        %p369 = pneg %p74
        %s370 = smul.u32 4, %s23
        %p371 = scmp.lt.s32.totalorder %s370, 7
        %s372 = scalar_select %p371, %s370, 7
        %s373 = scalar_lea.vmem %s2, %s372
        %p374 = pneg %p103
        %p375 = pneg %p100
        %s376 = smul.u32 8, %s22
        %p377 = scmp.lt.s32.totalorder %s376, 15
        %s378 = scalar_select %p377, %s376, 15
        %s379 = smul.addr %s378, 8
        %s380 = scalar_lea.vmem %s3, %s379
        %p381 = pneg %p129
        %p382 = pneg %p126
        %p383 = pneg %p157
        %p384 = pneg %p154
        %s385 = sand.u32 %s144, 1
        %s386 = sand.u32 %s144, 1
        %s387 = smul.addr %s386, 128
        %s388 = scalar_lea.vmem [#allocation6], %s387
        %p389 = pneg %p183
        %p390 = pneg %p180
        %s391 = smul.u32 8, %s22
        %p392 = scmp.lt.s32.totalorder %s391, 15
        %s393 = scalar_select %p392, %s391, 15
        %s394 = smul.addr %s393, 8
        %s395 = scalar_lea.vmem %s5, %s394
        %p396 = pneg %p209
        %p397 = pneg %p206
        %s398 = smul.u32 8, %s22
        %p399 = scmp.lt.s32.totalorder %s398, 15
        %s400 = scalar_select %p399, %s398, 15
        %s401 = smul.addr %s400, 8
        %s402 = scalar_lea.vmem %s6, %s401
        %s403 = smul.u32 8, %s22
        %p404 = scmp.lt.s32.totalorder %s403, 15
        %s405 = scalar_select %p404, %s403, 15
        %s406 = smul.addr %s405, 4
        %s407 = scalar_lea.vmem %s0, %s406
        %s408 = smul.u32 8, %s22
        %s409 = smul.u32 4, %s23
        %s410 = smul.u32 4, %s23
        %p411 = scmp.lt.s32.totalorder %s410, 7
        %s412 = scalar_select %p411, %s410, 7
        %s413 = scalar_lea.vmem %s2, %s412
        %s414 = smul.u32 4, %s23
        %s415 = smul.u32 8, %s22
        %p416 = scmp.lt.s32.totalorder %s415, 15
        %s417 = scalar_select %p416, %s415, 15
        %s418 = smul.addr %s417, 8
        %s419 = scalar_lea.vmem %s3, %s418
        %s420 = smul.u32 8, %s22
        %s421 = smul.u32 8, %s22
        %s422 = smul.u32 4, %s23
        %s423 = smul.u32 8, %s22
        %p424 = scmp.lt.s32.totalorder %s423, 15
        %s425 = scalar_select %p424, %s423, 15
        %s426 = smul.addr %s425, 8
        %s427 = scalar_lea.vmem %s5, %s426
        %s428 = smul.u32 8, %s22
        %s429 = smul.u32 8, %s22
        %p430 = scmp.lt.s32.totalorder %s429, 15
        %s431 = scalar_select %p430, %s429, 15
        %s432 = smul.addr %s431, 8
        %s433 = scalar_lea.vmem %s6, %s432
        %s434 = smul.u32 8, %s22
        %p436 = scmp.eq.s32.totalorder %s23, 0
        // Predicated region
        $region60: #{_model_plus_loss.1} parent=54 // pred_check
          %p437 = pneg %p436
        $region61: #{_model_plus_loss.1} parent=54 // pred_check_branch
          %439 = sbr.rel (%p437) target = $region63
        $region62: #{_model_plus_loss.1} parent=54 // pred_region
          %vm440 = vcmask 7168
          %441 = vst.msk [vmem:[#allocation2] sm:$0xff] %vm440, -inf
          %442 = vst.msk [vmem:[#allocation2 + $0x8] sm:$0xff] %vm440, -inf
          %443 = vst.msk [vmem:[#allocation2 + $0x10] sm:$0xff] %vm440, -inf
          %444 = vst.msk [vmem:[#allocation2 + $0x18] sm:$0xff] %vm440, -inf
          %445 = vst.msk [vmem:[#allocation2 + $0x20] sm:$0xff] %vm440, -inf
          %446 = vst.msk [vmem:[#allocation2 + $0x28] sm:$0xff] %vm440, -inf
          %447 = vst.msk [vmem:[#allocation2 + $0x30] sm:$0xff] %vm440, -inf
          %448 = vst.msk [vmem:[#allocation2 + $0x38] sm:$0xff] %vm440, -inf
          %449 = vst.msk [vmem:[#allocation3] sm:$0xff] %vm440, 0.0
          %450 = vst.msk [vmem:[#allocation3 + $0x8] sm:$0xff] %vm440, 0.0
          %451 = vst.msk [vmem:[#allocation3 + $0x10] sm:$0xff] %vm440, 0.0
          %452 = vst.msk [vmem:[#allocation3 + $0x18] sm:$0xff] %vm440, 0.0
          %453 = vst.msk [vmem:[#allocation3 + $0x20] sm:$0xff] %vm440, 0.0
          %454 = vst.msk [vmem:[#allocation3 + $0x28] sm:$0xff] %vm440, 0.0
          %455 = vst.msk [vmem:[#allocation3 + $0x30] sm:$0xff] %vm440, 0.0
          %456 = vst.msk [vmem:[#allocation3 + $0x38] sm:$0xff] %vm440, 0.0
          %457 = vst.msk [vmem:[#allocation4] sm:$0xff] %vm440, 0.0
          %458 = vst.msk [vmem:[#allocation4 + $0x8] sm:$0xff] %vm440, 0.0
          %459 = vst.msk [vmem:[#allocation4 + $0x10] sm:$0xff] %vm440, 0.0
          %460 = vst.msk [vmem:[#allocation4 + $0x18] sm:$0xff] %vm440, 0.0
          %461 = vst.msk [vmem:[#allocation4 + $0x20] sm:$0xff] %vm440, 0.0
          %462 = vst.msk [vmem:[#allocation4 + $0x28] sm:$0xff] %vm440, 0.0
          %463 = vst.msk [vmem:[#allocation4 + $0x30] sm:$0xff] %vm440, 0.0
          %464 = vst.msk [vmem:[#allocation4 + $0x38] sm:$0xff] %vm440, 0.0
        $region63: #{_model_plus_loss.1} parent=54 // pred_fallthru
          _
        %v465 = vld [vmem:[%s407] sm:$0xf]
        %v466 = vld [vmem:[%s407 + $0x4] sm:$0xf]
        %v467 = vld [vmem:[%s407 + $0x8] sm:$0xf]
        %v468 = vld [vmem:[%s407 + $0xc] sm:$0xf]
        %v469 = vld [vmem:[%s407 + $0x10] sm:$0xf]
        %v470 = vld [vmem:[%s407 + $0x14] sm:$0xf]
        %v471 = vld [vmem:[%s407 + $0x18] sm:$0xf]
        %v472 = vld [vmem:[%s407 + $0x1c] sm:$0xf]
        %v473 = vld [vmem:[%s353] sm:$0xff]
        %v474 = vld [vmem:[%s353 + $0x8] sm:$0xff]
        %v475 = vld [vmem:[%s353 + $0x10] sm:$0xff]
        %v476 = vld [vmem:[%s353 + $0x18] sm:$0xff]
        %v477 = vld [vmem:[%s353 + $0x20] sm:$0xff]
        %v478 = vld [vmem:[%s353 + $0x28] sm:$0xff]
        %v479 = vld [vmem:[%s353 + $0x30] sm:$0xff]
        %v480 = vld [vmem:[%s353 + $0x38] sm:$0xff]
        %v481 = vld [vmem:[%s353 + $0x40] sm:$0xff]
        %v482 = vld [vmem:[%s353 + $0x48] sm:$0xff]
        %v483 = vld [vmem:[%s353 + $0x50] sm:$0xff]
        %v484 = vld [vmem:[%s353 + $0x58] sm:$0xff]
        %v485 = vld [vmem:[%s353 + $0x60] sm:$0xff]
        %v486 = vld [vmem:[%s353 + $0x68] sm:$0xff]
        %v487 = vld [vmem:[%s353 + $0x70] sm:$0xff]
        %v488 = vld [vmem:[%s353 + $0x78] sm:$0xff]
        %v489 = vld [vmem:[%s353 + $0x80] sm:$0xff]
        %v490 = vld [vmem:[%s353 + $0x88] sm:$0xff]
        %v491 = vld [vmem:[%s353 + $0x90] sm:$0xff]
        %v492 = vld [vmem:[%s353 + $0x98] sm:$0xff]
        %v493 = vld [vmem:[%s353 + $0xa0] sm:$0xff]
        %v494 = vld [vmem:[%s353 + $0xa8] sm:$0xff]
        %v495 = vld [vmem:[%s353 + $0xb0] sm:$0xff]
        %v496 = vld [vmem:[%s353 + $0xb8] sm:$0xff]
        %v497 = vld [vmem:[%s353 + $0xc0] sm:$0xff]
        %v498 = vld [vmem:[%s353 + $0xc8] sm:$0xff]
        %v499 = vld [vmem:[%s353 + $0xd0] sm:$0xff]
        %v500 = vld [vmem:[%s353 + $0xd8] sm:$0xff]
        %v501 = vld [vmem:[%s353 + $0xe0] sm:$0xff]
        %v502 = vld [vmem:[%s353 + $0xe8] sm:$0xff]
        %v503 = vld [vmem:[%s353 + $0xf0] sm:$0xff]
        %v504 = vld [vmem:[%s353 + $0xf8] sm:$0xff]
        %v505 = vld [vmem:[%s413] sm:$0xf]
        %v507 = vlaneseq
        %v508 = vshrl.u32 %v507, 7
        %v509 = vsub.s32 0, %v508
        %v510 = vrot.slane %v505, %v509
        %v511 = vlaneseq
        %v512 = vshrl.u32 %v511, 7
        %v513 = vsub.s32 1, %v512
        %v514 = vrot.slane %v505, %v513
        %v515 = vlaneseq
        %v516 = vshrl.u32 %v515, 7
        %v517 = vsub.s32 2, %v516
        %v518 = vrot.slane %v505, %v517
        %v519 = vlaneseq
        %v520 = vshrl.u32 %v519, 7
        %v521 = vsub.s32 3, %v520
        %v522 = vrot.slane %v505, %v521
        %v535 = vunpack.c.l.b16 %v465
        %v536 = vunpack.c.l.b16 %v466
        %v537 = vunpack.c.l.b16 %v467
        %v538 = vunpack.c.l.b16 %v468
        %v539 = vunpack.c.l.b16 %v469
        %v540 = vunpack.c.l.b16 %v470
        %v541 = vunpack.c.l.b16 %v471
        %v542 = vunpack.c.l.b16 %v472
        %v543 = vpack.c.b16 %v536, %v535
        %v544 = vpack.c.b16 %v538, %v537
        %v545 = vpack.c.b16 %v540, %v539
        %v546 = vpack.c.b16 %v542, %v541
        %v583 = vunpack.c.l.b16 %v473
        %v584 = vunpack.c.h.b16 %v473
        %v585 = vunpack.c.l.b16 %v474
        %v586 = vunpack.c.h.b16 %v474
        %v587 = vunpack.c.l.b16 %v475
        %v588 = vunpack.c.h.b16 %v475
        %v589 = vunpack.c.l.b16 %v476
        %v590 = vunpack.c.h.b16 %v476
        %v591 = vunpack.c.l.b16 %v477
        %v592 = vunpack.c.h.b16 %v477
        %v593 = vunpack.c.l.b16 %v478
        %v594 = vunpack.c.h.b16 %v478
        %v595 = vunpack.c.l.b16 %v479
        %v596 = vunpack.c.h.b16 %v479
        %v597 = vunpack.c.l.b16 %v480
        %v598 = vunpack.c.h.b16 %v480
        %v599 = vunpack.c.l.b16 %v481
        %v600 = vunpack.c.h.b16 %v481
        %v601 = vunpack.c.l.b16 %v482
        %v602 = vunpack.c.h.b16 %v482
        %v603 = vunpack.c.l.b16 %v483
        %v604 = vunpack.c.h.b16 %v483
        %v605 = vunpack.c.l.b16 %v484
        %v606 = vunpack.c.h.b16 %v484
        %v607 = vunpack.c.l.b16 %v485
        %v608 = vunpack.c.h.b16 %v485
        %v609 = vunpack.c.l.b16 %v486
        %v610 = vunpack.c.h.b16 %v486
        %v611 = vunpack.c.l.b16 %v487
        %v612 = vunpack.c.h.b16 %v487
        %v613 = vunpack.c.l.b16 %v488
        %v614 = vunpack.c.h.b16 %v488
        %v615 = vunpack.c.l.b16 %v489
        %v616 = vunpack.c.h.b16 %v489
        %v617 = vunpack.c.l.b16 %v490
        %v618 = vunpack.c.h.b16 %v490
        %v619 = vunpack.c.l.b16 %v491
        %v620 = vunpack.c.h.b16 %v491
        %v621 = vunpack.c.l.b16 %v492
        %v622 = vunpack.c.h.b16 %v492
        %v623 = vunpack.c.l.b16 %v493
        %v624 = vunpack.c.h.b16 %v493
        %v625 = vunpack.c.l.b16 %v494
        %v626 = vunpack.c.h.b16 %v494
        %v627 = vunpack.c.l.b16 %v495
        %v628 = vunpack.c.h.b16 %v495
        %v629 = vunpack.c.l.b16 %v496
        %v630 = vunpack.c.h.b16 %v496
        %v631 = vunpack.c.l.b16 %v497
        %v632 = vunpack.c.h.b16 %v497
        %v633 = vunpack.c.l.b16 %v498
        %v634 = vunpack.c.h.b16 %v498
        %v635 = vunpack.c.l.b16 %v499
        %v636 = vunpack.c.h.b16 %v499
        %v637 = vunpack.c.l.b16 %v500
        %v638 = vunpack.c.h.b16 %v500
        %v639 = vunpack.c.l.b16 %v501
        %v640 = vunpack.c.h.b16 %v501
        %v641 = vunpack.c.l.b16 %v502
        %v642 = vunpack.c.h.b16 %v502
        %v643 = vunpack.c.l.b16 %v503
        %v644 = vunpack.c.h.b16 %v503
        %v645 = vunpack.c.l.b16 %v504
        %v646 = vunpack.c.h.b16 %v504
        %v647 = vpack.c.b16 %v587, %v583
        %v648 = vpack.c.b16 %v588, %v584
        %v649 = vpack.c.b16 %v589, %v585
        %v650 = vpack.c.b16 %v590, %v586
        %v651 = vpack.c.b16 %v595, %v591
        %v652 = vpack.c.b16 %v596, %v592
        %v653 = vpack.c.b16 %v597, %v593
        %v654 = vpack.c.b16 %v598, %v594
        %v655 = vpack.c.b16 %v603, %v599
        %v656 = vpack.c.b16 %v604, %v600
        %v657 = vpack.c.b16 %v605, %v601
        %v658 = vpack.c.b16 %v606, %v602
        %v659 = vpack.c.b16 %v611, %v607
        %v660 = vpack.c.b16 %v612, %v608
        %v661 = vpack.c.b16 %v613, %v609
        %v662 = vpack.c.b16 %v614, %v610
        %v663 = vpack.c.b16 %v619, %v615
        %v664 = vpack.c.b16 %v620, %v616
        %v665 = vpack.c.b16 %v621, %v617
        %v666 = vpack.c.b16 %v622, %v618
        %v667 = vpack.c.b16 %v627, %v623
        %v668 = vpack.c.b16 %v628, %v624
        %v669 = vpack.c.b16 %v629, %v625
        %v670 = vpack.c.b16 %v630, %v626
        %v671 = vpack.c.b16 %v635, %v631
        %v672 = vpack.c.b16 %v636, %v632
        %v673 = vpack.c.b16 %v637, %v633
        %v674 = vpack.c.b16 %v638, %v634
        %v675 = vpack.c.b16 %v643, %v639
        %v676 = vpack.c.b16 %v644, %v640
        %v677 = vpack.c.b16 %v645, %v641
        %v678 = vpack.c.b16 %v646, %v642
        %711 = vmatprep.subr.bf16.mxu0 %v648
        %712 = vmatpush1.bf16.msra.mxu0 %v647
        %713 = vmatprep.subr.bf16.mxu0 %v652
        %714 = vmatpush1.bf16.msra.mxu0 %v651
        %715 = vmatprep.subr.bf16.mxu0 %v656
        %716 = vmatpush1.bf16.msra.mxu0 %v655
        %717 = vmatprep.subr.bf16.mxu0 %v660
        %718 = vmatpush1.bf16.msra.mxu0 %v659
        %719 = vmatprep.subr.bf16.mxu0 %v664
        %720 = vmatpush1.bf16.msra.mxu0 %v663
        %721 = vmatprep.subr.bf16.mxu0 %v668
        %722 = vmatpush1.bf16.msra.mxu0 %v667
        %723 = vmatprep.subr.bf16.mxu0 %v672
        %724 = vmatpush1.bf16.msra.mxu0 %v671
        %725 = vmatprep.subr.bf16.mxu0 %v676
        %726 = vmatpush1.bf16.msra.mxu0 %v675
        %727 = vmatprep.subr.bf16.mxu0 0
        %728 = vmatpush1.bf16.msra.mxu0 0
        %729 = vmatprep.subr.bf16.mxu0 0
        %730 = vmatpush1.bf16.msra.mxu0 0
        %731 = vmatprep.subr.bf16.mxu0 0
        %732 = vmatpush1.bf16.msra.mxu0 0
        %733 = vmatprep.subr.bf16.mxu0 0
        %734 = vmatpush1.bf16.msra.mxu0 0
        %735 = vmatprep.subr.bf16.mxu0 0
        %736 = vmatpush1.bf16.msra.mxu0 0
        %737 = vmatprep.subr.bf16.mxu0 0
        %738 = vmatpush1.bf16.msra.mxu0 0
        %739 = vmatprep.subr.bf16.mxu0 0
        %740 = vmatpush1.bf16.msra.mxu0 0
        %741 = vmatprep.subr.bf16.mxu0 0
        %742 = vmatpush1.bf16.msra.mxu0 0
        %743 = vmatprep.mubr.bf16.mxu0 0
        %744 = vmatmul.mubr.bf16.gmra.mrb[0].mxu0 %v543
        %v745 = vpop.f32.mrb[0].mxu0
        %v746 = vadd.f32 %v510, %v745
        %v747 = vpop.f32.mrb[0].mxu0
        %v748 = vadd.f32 %v514, %v747
        %v749 = vpop.f32.mrb[0].mxu0
        %v750 = vadd.f32 %v510, %v749
        %v751 = vpop.f32.mrb[0].mxu0
        %v752 = vadd.f32 %v514, %v751
        %753 = vmatprep.mubr.bf16.mxu0 0
        %754 = vmatmul.mubr.bf16.gmra.mrb[0].mxu0 %v544
        %v755 = vpop.f32.mrb[0].mxu0
        %v756 = vadd.f32 %v510, %v755
        %v757 = vpop.f32.mrb[0].mxu0
        %v758 = vadd.f32 %v514, %v757
        %v759 = vpop.f32.mrb[0].mxu0
        %v760 = vadd.f32 %v510, %v759
        %v761 = vpop.f32.mrb[0].mxu0
        %v762 = vadd.f32 %v514, %v761
        %763 = vmatprep.mubr.bf16.mxu0 0
        %764 = vmatmul.mubr.bf16.gmra.mrb[0].mxu0 %v545
        %v765 = vpop.f32.mrb[0].mxu0
        %v766 = vadd.f32 %v510, %v765
        %v767 = vpop.f32.mrb[0].mxu0
        %v768 = vadd.f32 %v514, %v767
        %v769 = vpop.f32.mrb[0].mxu0
        %v770 = vadd.f32 %v510, %v769
        %v771 = vpop.f32.mrb[0].mxu0
        %v772 = vadd.f32 %v514, %v771
        %773 = vmatprep.mubr.bf16.mxu0 0
        %774 = vmatmul.mubr.bf16.gmra.mrb[0].mxu0 %v546
        %v775 = vpop.f32.mrb[0].mxu0
        %v776 = vadd.f32 %v510, %v775
        %v777 = vpop.f32.mrb[0].mxu0
        %v778 = vadd.f32 %v514, %v777
        %v779 = vpop.f32.mrb[0].mxu0
        %v780 = vadd.f32 %v510, %v779
        %v781 = vpop.f32.mrb[0].mxu0
        %v782 = vadd.f32 %v514, %v781
        %783 = vdwg.mxu0
        %784 = vmatprep.subr.bf16.mxu0 %v650
        %785 = vmatpush1.bf16.msra.mxu0 %v649
        %786 = vmatprep.subr.bf16.mxu0 %v654
        %787 = vmatpush1.bf16.msra.mxu0 %v653
        %788 = vmatprep.subr.bf16.mxu0 %v658
        %789 = vmatpush1.bf16.msra.mxu0 %v657
        %790 = vmatprep.subr.bf16.mxu0 %v662
        %791 = vmatpush1.bf16.msra.mxu0 %v661
        %792 = vmatprep.subr.bf16.mxu0 %v666
        %793 = vmatpush1.bf16.msra.mxu0 %v665
        %794 = vmatprep.subr.bf16.mxu0 %v670
        %795 = vmatpush1.bf16.msra.mxu0 %v669
        %796 = vmatprep.subr.bf16.mxu0 %v674
        %797 = vmatpush1.bf16.msra.mxu0 %v673
        %798 = vmatprep.subr.bf16.mxu0 %v678
        %799 = vmatpush1.bf16.msra.mxu0 %v677
        %800 = vmatprep.subr.bf16.mxu0 0
        %801 = vmatpush1.bf16.msra.mxu0 0
        %802 = vmatprep.subr.bf16.mxu0 0
        %803 = vmatpush1.bf16.msra.mxu0 0
        %804 = vmatprep.subr.bf16.mxu0 0
        %805 = vmatpush1.bf16.msra.mxu0 0
        %806 = vmatprep.subr.bf16.mxu0 0
        %807 = vmatpush1.bf16.msra.mxu0 0
        %808 = vmatprep.subr.bf16.mxu0 0
        %809 = vmatpush1.bf16.msra.mxu0 0
        %810 = vmatprep.subr.bf16.mxu0 0
        %811 = vmatpush1.bf16.msra.mxu0 0
        %812 = vmatprep.subr.bf16.mxu0 0
        %813 = vmatpush1.bf16.msra.mxu0 0
        %814 = vmatprep.subr.bf16.mxu0 0
        %815 = vmatpush1.bf16.msra.mxu0 0
        %816 = vmatprep.mubr.bf16.mxu0 0
        %817 = vmatmul.mubr.bf16.gmra.mrb[0].mxu0 %v543
        %v818 = vpop.f32.mrb[0].mxu0
        %v819 = vadd.f32 %v518, %v818
        %v820 = vpop.f32.mrb[0].mxu0
        %v821 = vadd.f32 %v522, %v820
        %v822 = vpop.f32.mrb[0].mxu0
        %v823 = vadd.f32 %v518, %v822
        %v824 = vpop.f32.mrb[0].mxu0
        %v825 = vadd.f32 %v522, %v824
        %826 = vmatprep.mubr.bf16.mxu0 0
        %827 = vmatmul.mubr.bf16.gmra.mrb[0].mxu0 %v544
        %v828 = vpop.f32.mrb[0].mxu0
        %v829 = vadd.f32 %v518, %v828
        %v830 = vpop.f32.mrb[0].mxu0
        %v831 = vadd.f32 %v522, %v830
        %v832 = vpop.f32.mrb[0].mxu0
        %v833 = vadd.f32 %v518, %v832
        %v834 = vpop.f32.mrb[0].mxu0
        %v835 = vadd.f32 %v522, %v834
        %836 = vmatprep.mubr.bf16.mxu0 0
        %837 = vmatmul.mubr.bf16.gmra.mrb[0].mxu0 %v545
        %v838 = vpop.f32.mrb[0].mxu0
        %v839 = vadd.f32 %v518, %v838
        %v840 = vpop.f32.mrb[0].mxu0
        %v841 = vadd.f32 %v522, %v840
        %v842 = vpop.f32.mrb[0].mxu0
        %v843 = vadd.f32 %v518, %v842
        %v844 = vpop.f32.mrb[0].mxu0
        %v845 = vadd.f32 %v522, %v844
        %846 = vmatprep.mubr.bf16.mxu0 0
        %847 = vmatmul.mubr.bf16.gmra.mrb[0].mxu0 %v546
        %v848 = vpop.f32.mrb[0].mxu0
        %v849 = vadd.f32 %v518, %v848
        %v850 = vpop.f32.mrb[0].mxu0
        %v851 = vadd.f32 %v522, %v850
        %v852 = vpop.f32.mrb[0].mxu0
        %v853 = vadd.f32 %v518, %v852
        %v854 = vpop.f32.mrb[0].mxu0
        %v855 = vadd.f32 %v522, %v854
        %856 = vdwg.mxu0
        %v857 = vpack.c.bf16 %v750, %v746
        %v858 = vpack.c.bf16 %v752, %v748
        %v859 = vpack.c.bf16 %v823, %v819
        %v860 = vpack.c.bf16 %v825, %v821
        %v861 = vpack.c.bf16 %v760, %v756
        %v862 = vpack.c.bf16 %v762, %v758
        %v863 = vpack.c.bf16 %v833, %v829
        %v864 = vpack.c.bf16 %v835, %v831
        %v865 = vpack.c.bf16 %v770, %v766
        %v866 = vpack.c.bf16 %v772, %v768
        %v867 = vpack.c.bf16 %v843, %v839
        %v868 = vpack.c.bf16 %v845, %v841
        %v869 = vpack.c.bf16 %v780, %v776
        %v870 = vpack.c.bf16 %v782, %v778
        %v871 = vpack.c.bf16 %v853, %v849
        %v872 = vpack.c.bf16 %v855, %v851
        %v889 = vunpack.c.l.b16 %v857
        %v890 = vunpack.c.l.b16 %v858
        %v891 = vunpack.c.l.b16 %v859
        %v892 = vunpack.c.l.b16 %v860
        %v893 = vunpack.c.h.b16 %v857
        %v894 = vunpack.c.h.b16 %v858
        %v895 = vunpack.c.h.b16 %v859
        %v896 = vunpack.c.h.b16 %v860
        %v897 = vunpack.c.l.b16 %v861
        %v898 = vunpack.c.l.b16 %v862
        %v899 = vunpack.c.l.b16 %v863
        %v900 = vunpack.c.l.b16 %v864
        %v901 = vunpack.c.h.b16 %v861
        %v902 = vunpack.c.h.b16 %v862
        %v903 = vunpack.c.h.b16 %v863
        %v904 = vunpack.c.h.b16 %v864
        %v905 = vunpack.c.l.b16 %v865
        %v906 = vunpack.c.l.b16 %v866
        %v907 = vunpack.c.l.b16 %v867
        %v908 = vunpack.c.l.b16 %v868
        %v909 = vunpack.c.h.b16 %v865
        %v910 = vunpack.c.h.b16 %v866
        %v911 = vunpack.c.h.b16 %v867
        %v912 = vunpack.c.h.b16 %v868
        %v913 = vunpack.c.l.b16 %v869
        %v914 = vunpack.c.l.b16 %v870
        %v915 = vunpack.c.l.b16 %v871
        %v916 = vunpack.c.l.b16 %v872
        %v917 = vunpack.c.h.b16 %v869
        %v918 = vunpack.c.h.b16 %v870
        %v919 = vunpack.c.h.b16 %v871
        %v920 = vunpack.c.h.b16 %v872
        %v921 = vpack.c.b16 %v890, %v889
        %v922 = vpack.c.b16 %v892, %v891
        %v923 = vpack.c.b16 %v894, %v893
        %v924 = vpack.c.b16 %v896, %v895
        %v925 = vpack.c.b16 %v898, %v897
        %v926 = vpack.c.b16 %v900, %v899
        %v927 = vpack.c.b16 %v902, %v901
        %v928 = vpack.c.b16 %v904, %v903
        %v929 = vpack.c.b16 %v906, %v905
        %v930 = vpack.c.b16 %v908, %v907
        %v931 = vpack.c.b16 %v910, %v909
        %v932 = vpack.c.b16 %v912, %v911
        %v933 = vpack.c.b16 %v914, %v913
        %v934 = vpack.c.b16 %v916, %v915
        %v935 = vpack.c.b16 %v918, %v917
        %v936 = vpack.c.b16 %v920, %v919
        %953 = vst [vmem:[%s388] sm:$0xff] %v921
        %954 = vst [vmem:[%s388 + $0x8] sm:$0xff] %v922
        %955 = vst [vmem:[%s388 + $0x10] sm:$0xff] %v923
        %956 = vst [vmem:[%s388 + $0x18] sm:$0xff] %v924
        %957 = vst [vmem:[%s388 + $0x20] sm:$0xff] %v925
        %958 = vst [vmem:[%s388 + $0x28] sm:$0xff] %v926
        %959 = vst [vmem:[%s388 + $0x30] sm:$0xff] %v927
        %960 = vst [vmem:[%s388 + $0x38] sm:$0xff] %v928
        %961 = vst [vmem:[%s388 + $0x40] sm:$0xff] %v929
        %962 = vst [vmem:[%s388 + $0x48] sm:$0xff] %v930
        %963 = vst [vmem:[%s388 + $0x50] sm:$0xff] %v931
        %964 = vst [vmem:[%s388 + $0x58] sm:$0xff] %v932
        %965 = vst [vmem:[%s388 + $0x60] sm:$0xff] %v933
        %966 = vst [vmem:[%s388 + $0x68] sm:$0xff] %v934
        %967 = vst [vmem:[%s388 + $0x70] sm:$0xff] %v935
        %968 = vst [vmem:[%s388 + $0x78] sm:$0xff] %v936
        %v969 = vld [vmem:[#allocation2] sm:$0xff]
        %v970 = vld [vmem:[#allocation2 + $0x8] sm:$0xff]
        %v971 = vld [vmem:[#allocation2 + $0x10] sm:$0xff]
        %v972 = vld [vmem:[#allocation2 + $0x18] sm:$0xff]
        %v973 = vld [vmem:[#allocation2 + $0x20] sm:$0xff]
        %v974 = vld [vmem:[#allocation2 + $0x28] sm:$0xff]
        %v975 = vld [vmem:[#allocation2 + $0x30] sm:$0xff]
        %v976 = vld [vmem:[#allocation2 + $0x38] sm:$0xff]
        %v977 = vmax.f32 %v746, %v748
        %v978 = vmax.f32 %v977, %v819
        %v979 = vmax.f32 %v978, %v821
        %980 = vmax.xlane.f32.xlu0 %v979
        %v981 = vpop.xlane.xlu0 %980
        %v982 = vmax.f32 %v750, %v752
        %v983 = vmax.f32 %v982, %v823
        %v984 = vmax.f32 %v983, %v825
        %985 = vmax.xlane.f32.xlu0 %v984
        %v986 = vpop.xlane.xlu0 %985
        %v987 = vmax.f32 %v756, %v758
        %v988 = vmax.f32 %v987, %v829
        %v989 = vmax.f32 %v988, %v831
        %990 = vmax.xlane.f32.xlu0 %v989
        %v991 = vpop.xlane.xlu0 %990
        %v992 = vmax.f32 %v760, %v762
        %v993 = vmax.f32 %v992, %v833
        %v994 = vmax.f32 %v993, %v835
        %995 = vmax.xlane.f32.xlu0 %v994
        %v996 = vpop.xlane.xlu0 %995
        %v997 = vmax.f32 %v766, %v768
        %v998 = vmax.f32 %v997, %v839
        %v999 = vmax.f32 %v998, %v841
        %1000 = vmax.xlane.f32.xlu0 %v999
        %v1001 = vpop.xlane.xlu0 %1000
        %v1002 = vmax.f32 %v770, %v772
        %v1003 = vmax.f32 %v1002, %v843
        %v1004 = vmax.f32 %v1003, %v845
        %1005 = vmax.xlane.f32.xlu0 %v1004
        %v1006 = vpop.xlane.xlu0 %1005
        %v1007 = vmax.f32 %v776, %v778
        %v1008 = vmax.f32 %v1007, %v849
        %v1009 = vmax.f32 %v1008, %v851
        %1010 = vmax.xlane.f32.xlu0 %v1009
        %v1011 = vpop.xlane.xlu0 %1010
        %v1012 = vmax.f32 %v780, %v782
        %v1013 = vmax.f32 %v1012, %v853
        %v1014 = vmax.f32 %v1013, %v855
        %1015 = vmax.xlane.f32.xlu0 %v1014
        %v1016 = vpop.xlane.xlu0 %1015
        %v1017 = vmax.f32 %v969, %v981
        %v1018 = vmax.f32 %v970, %v986
        %v1019 = vmax.f32 %v971, %v991
        %v1020 = vmax.f32 %v972, %v996
        %v1021 = vmax.f32 %v973, %v1001
        %v1022 = vmax.f32 %v974, %v1006
        %v1023 = vmax.f32 %v975, %v1011
        %v1024 = vmax.f32 %v976, %v1016
        %v1025 = vsub.f32 %v969, %v1017
        %v1026 = vsub.f32 %v970, %v1018
        %v1027 = vsub.f32 %v971, %v1019
        %v1028 = vsub.f32 %v972, %v1020
        %v1029 = vsub.f32 %v973, %v1021
        %v1030 = vsub.f32 %v974, %v1022
        %v1031 = vsub.f32 %v975, %v1023
        %v1032 = vsub.f32 %v976, %v1024
        %v1033 = vmul.f32 %v1025, 1.442695
        %v1034 = vpow.pop %v1033
        %v1035 = vmul.f32 %v1026, 1.442695
        %v1036 = vpow.pop %v1035
        %v1037 = vmul.f32 %v1027, 1.442695
        %v1038 = vpow.pop %v1037
        %v1039 = vmul.f32 %v1028, 1.442695
        %v1040 = vpow.pop %v1039
        %v1041 = vmul.f32 %v1029, 1.442695
        %v1042 = vpow.pop %v1041
        %v1043 = vmul.f32 %v1030, 1.442695
        %v1044 = vpow.pop %v1043
        %v1045 = vmul.f32 %v1031, 1.442695
        %v1046 = vpow.pop %v1045
        %v1047 = vmul.f32 %v1032, 1.442695
        %v1048 = vpow.pop %v1047
        %v1049 = vld [vmem:[#allocation3] sm:$0xff]
        %v1050 = vld [vmem:[#allocation3 + $0x8] sm:$0xff]
        %v1051 = vld [vmem:[#allocation3 + $0x10] sm:$0xff]
        %v1052 = vld [vmem:[#allocation3 + $0x18] sm:$0xff]
        %v1053 = vld [vmem:[#allocation3 + $0x20] sm:$0xff]
        %v1054 = vld [vmem:[#allocation3 + $0x28] sm:$0xff]
        %v1055 = vld [vmem:[#allocation3 + $0x30] sm:$0xff]
        %v1056 = vld [vmem:[#allocation3 + $0x38] sm:$0xff]
        %v1057 = vmul.f32 %v1034, %v1049
        %v1058 = vmul.f32 %v1036, %v1050
        %v1059 = vmul.f32 %v1038, %v1051
        %v1060 = vmul.f32 %v1040, %v1052
        %v1061 = vmul.f32 %v1042, %v1053
        %v1062 = vmul.f32 %v1044, %v1054
        %v1063 = vmul.f32 %v1046, %v1055
        %v1064 = vmul.f32 %v1048, %v1056
        %1066 = vset.pattern.permute.xlu0 0
        %1067 = vperm.xlu0 %1066, %v1017
        %v1068 = vpop.permute.xlu0 %1067
        %1071 = vset.pattern.permute.xlu0 0
        %1072 = vperm.xlu0 %1071, %v1018
        %v1073 = vpop.permute.xlu0 %1072
        %1076 = vset.pattern.permute.xlu0 0
        %1077 = vperm.xlu0 %1076, %v1019
        %v1078 = vpop.permute.xlu0 %1077
        %1081 = vset.pattern.permute.xlu0 0
        %1082 = vperm.xlu0 %1081, %v1020
        %v1083 = vpop.permute.xlu0 %1082
        %1086 = vset.pattern.permute.xlu0 0
        %1087 = vperm.xlu0 %1086, %v1021
        %v1088 = vpop.permute.xlu0 %1087
        %1091 = vset.pattern.permute.xlu0 0
        %1092 = vperm.xlu0 %1091, %v1022
        %v1093 = vpop.permute.xlu0 %1092
        %1096 = vset.pattern.permute.xlu0 0
        %1097 = vperm.xlu0 %1096, %v1023
        %v1098 = vpop.permute.xlu0 %1097
        %1101 = vset.pattern.permute.xlu0 0
        %1102 = vperm.xlu0 %1101, %v1024
        %v1103 = vpop.permute.xlu0 %1102
        %v1105 = vsub.f32 %v746, %v1068
        %v1106 = vsub.f32 %v748, %v1068
        %v1107 = vsub.f32 %v819, %v1068
        %v1108 = vsub.f32 %v821, %v1068
        %v1109 = vsub.f32 %v750, %v1073
        %v1110 = vsub.f32 %v752, %v1073
        %v1111 = vsub.f32 %v823, %v1073
        %v1112 = vsub.f32 %v825, %v1073
        %v1113 = vsub.f32 %v756, %v1078
        %v1114 = vsub.f32 %v758, %v1078
        %v1115 = vsub.f32 %v829, %v1078
        %v1116 = vsub.f32 %v831, %v1078
        %v1117 = vsub.f32 %v760, %v1083
        %v1118 = vsub.f32 %v762, %v1083
        %v1119 = vsub.f32 %v833, %v1083
        %v1120 = vsub.f32 %v835, %v1083
        %v1121 = vsub.f32 %v766, %v1088
        %v1122 = vsub.f32 %v768, %v1088
        %v1123 = vsub.f32 %v839, %v1088
        %v1124 = vsub.f32 %v841, %v1088
        %v1125 = vsub.f32 %v770, %v1093
        %v1126 = vsub.f32 %v772, %v1093
        %v1127 = vsub.f32 %v843, %v1093
        %v1128 = vsub.f32 %v845, %v1093
        %v1129 = vsub.f32 %v776, %v1098
        %v1130 = vsub.f32 %v778, %v1098
        %v1131 = vsub.f32 %v849, %v1098
        %v1132 = vsub.f32 %v851, %v1098
        %v1133 = vsub.f32 %v780, %v1103
        %v1134 = vsub.f32 %v782, %v1103
        %v1135 = vsub.f32 %v853, %v1103
        %v1136 = vsub.f32 %v855, %v1103
        %v1137 = vmul.f32 %v1105, 1.442695
        %v1138 = vpow.pop %v1137
        %v1139 = vmul.f32 %v1106, 1.442695
        %v1140 = vpow.pop %v1139
        %v1141 = vmul.f32 %v1107, 1.442695
        %v1142 = vpow.pop %v1141
        %v1143 = vmul.f32 %v1108, 1.442695
        %v1144 = vpow.pop %v1143
        %v1145 = vmul.f32 %v1109, 1.442695
        %v1146 = vpow.pop %v1145
        %v1147 = vmul.f32 %v1110, 1.442695
        %v1148 = vpow.pop %v1147
        %v1149 = vmul.f32 %v1111, 1.442695
        %v1150 = vpow.pop %v1149
        %v1151 = vmul.f32 %v1112, 1.442695
        %v1152 = vpow.pop %v1151
        %v1153 = vmul.f32 %v1113, 1.442695
        %v1154 = vpow.pop %v1153
        %v1155 = vmul.f32 %v1114, 1.442695
        %v1156 = vpow.pop %v1155
        %v1157 = vmul.f32 %v1115, 1.442695
        %v1158 = vpow.pop %v1157
        %v1159 = vmul.f32 %v1116, 1.442695
        %v1160 = vpow.pop %v1159
        %v1161 = vmul.f32 %v1117, 1.442695
        %v1162 = vpow.pop %v1161
        %v1163 = vmul.f32 %v1118, 1.442695
        %v1164 = vpow.pop %v1163
        %v1165 = vmul.f32 %v1119, 1.442695
        %v1166 = vpow.pop %v1165
        %v1167 = vmul.f32 %v1120, 1.442695
        %v1168 = vpow.pop %v1167
        %v1169 = vmul.f32 %v1121, 1.442695
        %v1170 = vpow.pop %v1169
        %v1171 = vmul.f32 %v1122, 1.442695
        %v1172 = vpow.pop %v1171
        %v1173 = vmul.f32 %v1123, 1.442695
        %v1174 = vpow.pop %v1173
        %v1175 = vmul.f32 %v1124, 1.442695
        %v1176 = vpow.pop %v1175
        %v1177 = vmul.f32 %v1125, 1.442695
        %v1178 = vpow.pop %v1177
        %v1179 = vmul.f32 %v1126, 1.442695
        %v1180 = vpow.pop %v1179
        %v1181 = vmul.f32 %v1127, 1.442695
        %v1182 = vpow.pop %v1181
        %v1183 = vmul.f32 %v1128, 1.442695
        %v1184 = vpow.pop %v1183
        %v1185 = vmul.f32 %v1129, 1.442695
        %v1186 = vpow.pop %v1185
        %v1187 = vmul.f32 %v1130, 1.442695
        %v1188 = vpow.pop %v1187
        %v1189 = vmul.f32 %v1131, 1.442695
        %v1190 = vpow.pop %v1189
        %v1191 = vmul.f32 %v1132, 1.442695
        %v1192 = vpow.pop %v1191
        %v1193 = vmul.f32 %v1133, 1.442695
        %v1194 = vpow.pop %v1193
        %v1195 = vmul.f32 %v1134, 1.442695
        %v1196 = vpow.pop %v1195
        %v1197 = vmul.f32 %v1135, 1.442695
        %v1198 = vpow.pop %v1197
        %v1199 = vmul.f32 %v1136, 1.442695
        %v1200 = vpow.pop %v1199
        %v1201 = vadd.f32 %v1138, %v1140
        %v1202 = vadd.f32 %v1201, %v1142
        %v1203 = vadd.f32 %v1202, %v1144
        %1204 = vadd.xlane.f32.xlu0 %v1203
        %v1205 = vpop.xlane.xlu0 %1204
        %v1206 = vadd.f32 %v1146, %v1148
        %v1207 = vadd.f32 %v1206, %v1150
        %v1208 = vadd.f32 %v1207, %v1152
        %1209 = vadd.xlane.f32.xlu0 %v1208
        %v1210 = vpop.xlane.xlu0 %1209
        %v1211 = vadd.f32 %v1154, %v1156
        %v1212 = vadd.f32 %v1211, %v1158
        %v1213 = vadd.f32 %v1212, %v1160
        %1214 = vadd.xlane.f32.xlu0 %v1213
        %v1215 = vpop.xlane.xlu0 %1214
        %v1216 = vadd.f32 %v1162, %v1164
        %v1217 = vadd.f32 %v1216, %v1166
        %v1218 = vadd.f32 %v1217, %v1168
        %1219 = vadd.xlane.f32.xlu0 %v1218
        %v1220 = vpop.xlane.xlu0 %1219
        %v1221 = vadd.f32 %v1170, %v1172
        %v1222 = vadd.f32 %v1221, %v1174
        %v1223 = vadd.f32 %v1222, %v1176
        %1224 = vadd.xlane.f32.xlu0 %v1223
        %v1225 = vpop.xlane.xlu0 %1224
        %v1226 = vadd.f32 %v1178, %v1180
        %v1227 = vadd.f32 %v1226, %v1182
        %v1228 = vadd.f32 %v1227, %v1184
        %1229 = vadd.xlane.f32.xlu0 %v1228
        %v1230 = vpop.xlane.xlu0 %1229
        %v1231 = vadd.f32 %v1186, %v1188
        %v1232 = vadd.f32 %v1231, %v1190
        %v1233 = vadd.f32 %v1232, %v1192
        %1234 = vadd.xlane.f32.xlu0 %v1233
        %v1235 = vpop.xlane.xlu0 %1234
        %v1236 = vadd.f32 %v1194, %v1196
        %v1237 = vadd.f32 %v1236, %v1198
        %v1238 = vadd.f32 %v1237, %v1200
        %1239 = vadd.xlane.f32.xlu0 %v1238
        %v1240 = vpop.xlane.xlu0 %1239
        %v1241 = vadd.f32 %v1057, %v1205
        %v1242 = vadd.f32 %v1058, %v1210
        %v1243 = vadd.f32 %v1059, %v1215
        %v1244 = vadd.f32 %v1060, %v1220
        %v1245 = vadd.f32 %v1061, %v1225
        %v1246 = vadd.f32 %v1062, %v1230
        %v1247 = vadd.f32 %v1063, %v1235
        %v1248 = vadd.f32 %v1064, %v1240
        %vm1249 = vcmask 7168
        %1250 = vst.msk [vmem:[#allocation3] sm:$0xff] %vm1249, %v1241
        %1251 = vst.msk [vmem:[#allocation3 + $0x8] sm:$0xff] %vm1249, %v1242
        %1252 = vst.msk [vmem:[#allocation3 + $0x10] sm:$0xff] %vm1249, %v1243
        %1253 = vst.msk [vmem:[#allocation3 + $0x18] sm:$0xff] %vm1249, %v1244
        %1254 = vst.msk [vmem:[#allocation3 + $0x20] sm:$0xff] %vm1249, %v1245
        %1255 = vst.msk [vmem:[#allocation3 + $0x28] sm:$0xff] %vm1249, %v1246
        %1256 = vst.msk [vmem:[#allocation3 + $0x30] sm:$0xff] %vm1249, %v1247
        %1257 = vst.msk [vmem:[#allocation3 + $0x38] sm:$0xff] %vm1249, %v1248
        %1258 = vst.msk [vmem:[#allocation2] sm:$0xff] %vm1249, %v1017
        %1259 = vst.msk [vmem:[#allocation2 + $0x8] sm:$0xff] %vm1249, %v1018
        %1260 = vst.msk [vmem:[#allocation2 + $0x10] sm:$0xff] %vm1249, %v1019
        %1261 = vst.msk [vmem:[#allocation2 + $0x18] sm:$0xff] %vm1249, %v1020
        %1262 = vst.msk [vmem:[#allocation2 + $0x20] sm:$0xff] %vm1249, %v1021
        %1263 = vst.msk [vmem:[#allocation2 + $0x28] sm:$0xff] %vm1249, %v1022
        %1264 = vst.msk [vmem:[#allocation2 + $0x30] sm:$0xff] %vm1249, %v1023
        %1265 = vst.msk [vmem:[#allocation2 + $0x38] sm:$0xff] %vm1249, %v1024
        %v1266 = vlaneseq
        %v1267 = vand.u32 %v1266, 127
        %v1268 = vadd.s32 %v1267, 128
        %v1269 = vadd.s32 %v1267, 256
        %v1270 = vadd.s32 %v1267, 384
        %v1271 = vld [vmem:[%s419] sm:$0xff]
        %v1272 = vld [vmem:[%s419 + $0x8] sm:$0xff]
        %v1273 = vld [vmem:[%s419 + $0x10] sm:$0xff]
        %v1274 = vld [vmem:[%s419 + $0x18] sm:$0xff]
        %v1275 = vld [vmem:[%s419 + $0x20] sm:$0xff]
        %v1276 = vld [vmem:[%s419 + $0x28] sm:$0xff]
        %v1277 = vld [vmem:[%s419 + $0x30] sm:$0xff]
        %v1278 = vld [vmem:[%s419 + $0x38] sm:$0xff]
        %vm1279 = vcmp.gt.s32.totalorder %v1271, 0
        %v1280 = vsel %vm1279, %v1271, 0
        %vm1281 = vcmp.gt.s32.totalorder %v1272, 0
        %v1282 = vsel %vm1281, %v1272, 0
        %vm1283 = vcmp.gt.s32.totalorder %v1273, 0
        %v1284 = vsel %vm1283, %v1273, 0
        %vm1285 = vcmp.gt.s32.totalorder %v1274, 0
        %v1286 = vsel %vm1285, %v1274, 0
        %vm1287 = vcmp.gt.s32.totalorder %v1275, 0
        %v1288 = vsel %vm1287, %v1275, 0
        %vm1289 = vcmp.gt.s32.totalorder %v1276, 0
        %v1290 = vsel %vm1289, %v1276, 0
        %vm1291 = vcmp.gt.s32.totalorder %v1277, 0
        %v1292 = vsel %vm1291, %v1277, 0
        %vm1293 = vcmp.gt.s32.totalorder %v1278, 0
        %v1294 = vsel %vm1293, %v1278, 0
        %s1295 = smul.u32 %s23, 512
        %v1296 = vstv %s1295
        %v1297 = vsub.s32 %v1280, %v1296
        %v1298 = vsub.s32 %v1282, %v1296
        %v1299 = vsub.s32 %v1284, %v1296
        %v1300 = vsub.s32 %v1286, %v1296
        %v1301 = vsub.s32 %v1288, %v1296
        %v1302 = vsub.s32 %v1290, %v1296
        %v1303 = vsub.s32 %v1292, %v1296
        %v1304 = vsub.s32 %v1294, %v1296
        %1305 = vset.pattern.permute.xlu0 0
        %1306 = vperm.xlu0 %1305, %v1297
        %v1307 = vpop.permute.xlu0 %1306
        %1308 = vset.pattern.permute.xlu0 0
        %1309 = vperm.xlu0 %1308, %v1298
        %v1310 = vpop.permute.xlu0 %1309
        %1311 = vset.pattern.permute.xlu0 0
        %1312 = vperm.xlu0 %1311, %v1299
        %v1313 = vpop.permute.xlu0 %1312
        %1314 = vset.pattern.permute.xlu0 0
        %1315 = vperm.xlu0 %1314, %v1300
        %v1316 = vpop.permute.xlu0 %1315
        %1317 = vset.pattern.permute.xlu0 0
        %1318 = vperm.xlu0 %1317, %v1301
        %v1319 = vpop.permute.xlu0 %1318
        %1320 = vset.pattern.permute.xlu0 0
        %1321 = vperm.xlu0 %1320, %v1302
        %v1322 = vpop.permute.xlu0 %1321
        %1323 = vset.pattern.permute.xlu0 0
        %1324 = vperm.xlu0 %1323, %v1303
        %v1325 = vpop.permute.xlu0 %1324
        %1326 = vset.pattern.permute.xlu0 0
        %1327 = vperm.xlu0 %1326, %v1304
        %v1328 = vpop.permute.xlu0 %1327
        %vm1329 = vcmp.eq.s32.totalorder %v1267, %v1307
        %vm1330 = vcmp.eq.s32.totalorder %v1268, %v1307
        %vm1331 = vcmp.eq.s32.totalorder %v1269, %v1307
        %vm1332 = vcmp.eq.s32.totalorder %v1270, %v1307
        %vm1333 = vcmp.eq.s32.totalorder %v1267, %v1310
        %vm1334 = vcmp.eq.s32.totalorder %v1268, %v1310
        %vm1335 = vcmp.eq.s32.totalorder %v1269, %v1310
        %vm1336 = vcmp.eq.s32.totalorder %v1270, %v1310
        %vm1337 = vcmp.eq.s32.totalorder %v1267, %v1313
        %vm1338 = vcmp.eq.s32.totalorder %v1268, %v1313
        %vm1339 = vcmp.eq.s32.totalorder %v1269, %v1313
        %vm1340 = vcmp.eq.s32.totalorder %v1270, %v1313
        %vm1341 = vcmp.eq.s32.totalorder %v1267, %v1316
        %vm1342 = vcmp.eq.s32.totalorder %v1268, %v1316
        %vm1343 = vcmp.eq.s32.totalorder %v1269, %v1316
        %vm1344 = vcmp.eq.s32.totalorder %v1270, %v1316
        %vm1345 = vcmp.eq.s32.totalorder %v1267, %v1319
        %vm1346 = vcmp.eq.s32.totalorder %v1268, %v1319
        %vm1347 = vcmp.eq.s32.totalorder %v1269, %v1319
        %vm1348 = vcmp.eq.s32.totalorder %v1270, %v1319
        %vm1349 = vcmp.eq.s32.totalorder %v1267, %v1322
        %vm1350 = vcmp.eq.s32.totalorder %v1268, %v1322
        %vm1351 = vcmp.eq.s32.totalorder %v1269, %v1322
        %vm1352 = vcmp.eq.s32.totalorder %v1270, %v1322
        %vm1353 = vcmp.eq.s32.totalorder %v1267, %v1325
        %vm1354 = vcmp.eq.s32.totalorder %v1268, %v1325
        %vm1355 = vcmp.eq.s32.totalorder %v1269, %v1325
        %vm1356 = vcmp.eq.s32.totalorder %v1270, %v1325
        %vm1357 = vcmp.eq.s32.totalorder %v1267, %v1328
        %vm1358 = vcmp.eq.s32.totalorder %v1268, %v1328
        %vm1359 = vcmp.eq.s32.totalorder %v1269, %v1328
        %vm1360 = vcmp.eq.s32.totalorder %v1270, %v1328
        %v1361 = vld [vmem:[#allocation4] sm:$0xff]
        %v1362 = vld [vmem:[#allocation4 + $0x8] sm:$0xff]
        %v1363 = vld [vmem:[#allocation4 + $0x10] sm:$0xff]
        %v1364 = vld [vmem:[#allocation4 + $0x18] sm:$0xff]
        %v1365 = vld [vmem:[#allocation4 + $0x20] sm:$0xff]
        %v1366 = vld [vmem:[#allocation4 + $0x28] sm:$0xff]
        %v1367 = vld [vmem:[#allocation4 + $0x30] sm:$0xff]
        %v1368 = vld [vmem:[#allocation4 + $0x38] sm:$0xff]
        %v1369 = vsel %vm1329, %v746, 0.0
        %v1370 = vsel %vm1330, %v748, 0.0
        %v1371 = vsel %vm1331, %v819, 0.0
        %v1372 = vsel %vm1332, %v821, 0.0
        %v1373 = vsel %vm1333, %v750, 0.0
        %v1374 = vsel %vm1334, %v752, 0.0
        %v1375 = vsel %vm1335, %v823, 0.0
        %v1376 = vsel %vm1336, %v825, 0.0
        %v1377 = vsel %vm1337, %v756, 0.0
        %v1378 = vsel %vm1338, %v758, 0.0
        %v1379 = vsel %vm1339, %v829, 0.0
        %v1380 = vsel %vm1340, %v831, 0.0
        %v1381 = vsel %vm1341, %v760, 0.0
        %v1382 = vsel %vm1342, %v762, 0.0
        %v1383 = vsel %vm1343, %v833, 0.0
        %v1384 = vsel %vm1344, %v835, 0.0
        %v1385 = vsel %vm1345, %v766, 0.0
        %v1386 = vsel %vm1346, %v768, 0.0
        %v1387 = vsel %vm1347, %v839, 0.0
        %v1388 = vsel %vm1348, %v841, 0.0
        %v1389 = vsel %vm1349, %v770, 0.0
        %v1390 = vsel %vm1350, %v772, 0.0
        %v1391 = vsel %vm1351, %v843, 0.0
        %v1392 = vsel %vm1352, %v845, 0.0
        %v1393 = vsel %vm1353, %v776, 0.0
        %v1394 = vsel %vm1354, %v778, 0.0
        %v1395 = vsel %vm1355, %v849, 0.0
        %v1396 = vsel %vm1356, %v851, 0.0
        %v1397 = vsel %vm1357, %v780, 0.0
        %v1398 = vsel %vm1358, %v782, 0.0
        %v1399 = vsel %vm1359, %v853, 0.0
        %v1400 = vsel %vm1360, %v855, 0.0
        %v1401 = vadd.f32 %v1369, %v1370
        %v1402 = vadd.f32 %v1401, %v1371
        %v1403 = vadd.f32 %v1402, %v1372
        %1404 = vadd.xlane.f32.xlu0 %v1403
        %v1405 = vpop.xlane.xlu0 %1404
        %v1406 = vadd.f32 %v1373, %v1374
        %v1407 = vadd.f32 %v1406, %v1375
        %v1408 = vadd.f32 %v1407, %v1376
        %1409 = vadd.xlane.f32.xlu0 %v1408
        %v1410 = vpop.xlane.xlu0 %1409
        %v1411 = vadd.f32 %v1377, %v1378
        %v1412 = vadd.f32 %v1411, %v1379
        %v1413 = vadd.f32 %v1412, %v1380
        %1414 = vadd.xlane.f32.xlu0 %v1413
        %v1415 = vpop.xlane.xlu0 %1414
        %v1416 = vadd.f32 %v1381, %v1382
        %v1417 = vadd.f32 %v1416, %v1383
        %v1418 = vadd.f32 %v1417, %v1384
        %1419 = vadd.xlane.f32.xlu0 %v1418
        %v1420 = vpop.xlane.xlu0 %1419
        %v1421 = vadd.f32 %v1385, %v1386
        %v1422 = vadd.f32 %v1421, %v1387
        %v1423 = vadd.f32 %v1422, %v1388
        %1424 = vadd.xlane.f32.xlu0 %v1423
        %v1425 = vpop.xlane.xlu0 %1424
        %v1426 = vadd.f32 %v1389, %v1390
        %v1427 = vadd.f32 %v1426, %v1391
        %v1428 = vadd.f32 %v1427, %v1392
        %1429 = vadd.xlane.f32.xlu0 %v1428
        %v1430 = vpop.xlane.xlu0 %1429
        %v1431 = vadd.f32 %v1393, %v1394
        %v1432 = vadd.f32 %v1431, %v1395
        %v1433 = vadd.f32 %v1432, %v1396
        %1434 = vadd.xlane.f32.xlu0 %v1433
        %v1435 = vpop.xlane.xlu0 %1434
        %v1436 = vadd.f32 %v1397, %v1398
        %v1437 = vadd.f32 %v1436, %v1399
        %v1438 = vadd.f32 %v1437, %v1400
        %1439 = vadd.xlane.f32.xlu0 %v1438
        %v1440 = vpop.xlane.xlu0 %1439
        %v1441 = vadd.f32 %v1361, %v1405
        %v1442 = vadd.f32 %v1362, %v1410
        %v1443 = vadd.f32 %v1363, %v1415
        %v1444 = vadd.f32 %v1364, %v1420
        %v1445 = vadd.f32 %v1365, %v1425
        %v1446 = vadd.f32 %v1366, %v1430
        %v1447 = vadd.f32 %v1367, %v1435
        %v1448 = vadd.f32 %v1368, %v1440
        %1449 = vst.msk [vmem:[#allocation4] sm:$0xff] %vm1249, %v1441
        %1450 = vst.msk [vmem:[#allocation4 + $0x8] sm:$0xff] %vm1249, %v1442
        %1451 = vst.msk [vmem:[#allocation4 + $0x10] sm:$0xff] %vm1249, %v1443
        %1452 = vst.msk [vmem:[#allocation4 + $0x18] sm:$0xff] %vm1249, %v1444
        %1453 = vst.msk [vmem:[#allocation4 + $0x20] sm:$0xff] %vm1249, %v1445
        %1454 = vst.msk [vmem:[#allocation4 + $0x28] sm:$0xff] %vm1249, %v1446
        %1455 = vst.msk [vmem:[#allocation4 + $0x30] sm:$0xff] %vm1249, %v1447
        %1456 = vst.msk [vmem:[#allocation4 + $0x38] sm:$0xff] %vm1249, %v1448
        %p1457 = scmp.eq.s32.totalorder %s23, 1
        // Predicated region
        $region64: #{_model_plus_loss.1} parent=54 // pred_check
          %p1458 = pneg %p1457
        $region65: #{_model_plus_loss.1} parent=54 // pred_check_branch
          %1460 = sbr.rel (%p1458) target = $region67
        $region66: #{_model_plus_loss.1} parent=54 // pred_region
          %v1461 = vld [vmem:[#allocation2] sm:$0xff]
          %v1462 = vld [vmem:[#allocation2 + $0x8] sm:$0xff]
          %v1463 = vld [vmem:[#allocation2 + $0x10] sm:$0xff]
          %v1464 = vld [vmem:[#allocation2 + $0x18] sm:$0xff]
          %v1465 = vld [vmem:[#allocation2 + $0x20] sm:$0xff]
          %v1466 = vld [vmem:[#allocation2 + $0x28] sm:$0xff]
          %v1467 = vld [vmem:[#allocation2 + $0x30] sm:$0xff]
          %v1468 = vld [vmem:[#allocation2 + $0x38] sm:$0xff]
          %v1469 = vld [vmem:[#allocation3] sm:$0xff]
          %v1470 = vld [vmem:[#allocation3 + $0x8] sm:$0xff]
          %v1471 = vld [vmem:[#allocation3 + $0x10] sm:$0xff]
          %v1472 = vld [vmem:[#allocation3 + $0x18] sm:$0xff]
          %v1473 = vld [vmem:[#allocation3 + $0x20] sm:$0xff]
          %v1474 = vld [vmem:[#allocation3 + $0x28] sm:$0xff]
          %v1475 = vld [vmem:[#allocation3 + $0x30] sm:$0xff]
          %v1476 = vld [vmem:[#allocation3 + $0x38] sm:$0xff]
          %v1477 = vlog2.pop %v1469
          %v1478 = vmul.f32 %v1477, 0.6931472
          %v1479 = vlog2.pop %v1470
          %v1480 = vmul.f32 %v1479, 0.6931472
          %v1481 = vlog2.pop %v1471
          %v1482 = vmul.f32 %v1481, 0.6931472
          %v1483 = vlog2.pop %v1472
          %v1484 = vmul.f32 %v1483, 0.6931472
          %v1485 = vlog2.pop %v1473
          %v1486 = vmul.f32 %v1485, 0.6931472
          %v1487 = vlog2.pop %v1474
          %v1488 = vmul.f32 %v1487, 0.6931472
          %v1489 = vlog2.pop %v1475
          %v1490 = vmul.f32 %v1489, 0.6931472
          %v1491 = vlog2.pop %v1476
          %v1492 = vmul.f32 %v1491, 0.6931472
          %v1493 = vadd.f32 %v1461, %v1478
          %v1494 = vadd.f32 %v1462, %v1480
          %v1495 = vadd.f32 %v1463, %v1482
          %v1496 = vadd.f32 %v1464, %v1484
          %v1497 = vadd.f32 %v1465, %v1486
          %v1498 = vadd.f32 %v1466, %v1488
          %v1499 = vadd.f32 %v1467, %v1490
          %v1500 = vadd.f32 %v1468, %v1492
          %v1501 = vld [vmem:[#allocation4] sm:$0xff]
          %v1502 = vld [vmem:[#allocation4 + $0x8] sm:$0xff]
          %v1503 = vld [vmem:[#allocation4 + $0x10] sm:$0xff]
          %v1504 = vld [vmem:[#allocation4 + $0x18] sm:$0xff]
          %v1505 = vld [vmem:[#allocation4 + $0x20] sm:$0xff]
          %v1506 = vld [vmem:[#allocation4 + $0x28] sm:$0xff]
          %v1507 = vld [vmem:[#allocation4 + $0x30] sm:$0xff]
          %v1508 = vld [vmem:[#allocation4 + $0x38] sm:$0xff]
          %v1509 = vsub.f32 %v1493, %v1501
          %v1510 = vsub.f32 %v1494, %v1502
          %v1511 = vsub.f32 %v1495, %v1503
          %v1512 = vsub.f32 %v1496, %v1504
          %v1513 = vsub.f32 %v1497, %v1505
          %v1514 = vsub.f32 %v1498, %v1506
          %v1515 = vsub.f32 %v1499, %v1507
          %v1516 = vsub.f32 %v1500, %v1508
          %1517 = vst.msk [vmem:[%s427] sm:$0xff] %vm1249, %v1509
          %1518 = vst.msk [vmem:[%s427 + $0x8] sm:$0xff] %vm1249, %v1510
          %1519 = vst.msk [vmem:[%s427 + $0x10] sm:$0xff] %vm1249, %v1511
          %1520 = vst.msk [vmem:[%s427 + $0x18] sm:$0xff] %vm1249, %v1512
          %1521 = vst.msk [vmem:[%s427 + $0x20] sm:$0xff] %vm1249, %v1513
          %1522 = vst.msk [vmem:[%s427 + $0x28] sm:$0xff] %vm1249, %v1514
          %1523 = vst.msk [vmem:[%s427 + $0x30] sm:$0xff] %vm1249, %v1515
          %1524 = vst.msk [vmem:[%s427 + $0x38] sm:$0xff] %vm1249, %v1516
          %1525 = vst.msk [vmem:[%s433] sm:$0xff] %vm1249, %v1493
          %1526 = vst.msk [vmem:[%s433 + $0x8] sm:$0xff] %vm1249, %v1494
          %1527 = vst.msk [vmem:[%s433 + $0x10] sm:$0xff] %vm1249, %v1495
          %1528 = vst.msk [vmem:[%s433 + $0x18] sm:$0xff] %vm1249, %v1496
          %1529 = vst.msk [vmem:[%s433 + $0x20] sm:$0xff] %vm1249, %v1497
          %1530 = vst.msk [vmem:[%s433 + $0x28] sm:$0xff] %vm1249, %v1498
          %1531 = vst.msk [vmem:[%s433 + $0x30] sm:$0xff] %vm1249, %v1499
          %1532 = vst.msk [vmem:[%s433 + $0x38] sm:$0xff] %vm1249, %v1500
        $region67: #{_model_plus_loss.1} parent=54 // pred_fallthru
          _
        %s1533 = sand.u32 %s144, 1
        %s1534 = sand.u32 %s144, 1
        %s1535 = smul.addr %s1534, 128
        %s1536 = scalar_lea.vmem [#allocation6], %s1535
        %s1537 = smul.u32 8, %s22
        %p1538 = scmp.lt.s32.totalorder %s1537, 15
        %s1539 = scalar_select %p1538, %s1537, 15
        %s1540 = smul.addr %s1539, 8
        %s1541 = scalar_lea.vmem %s5, %s1540
        %s1542 = smul.u32 8, %s22
        %p1543 = scmp.lt.s32.totalorder %s1542, 15
        %s1544 = scalar_select %p1543, %s1542, 15
        %s1545 = smul.addr %s1544, 8
        %s1546 = scalar_lea.vmem %s6, %s1545
        // Predicated region
        $region68: #{_model_plus_loss.1} parent=54 // pred_check
          %p1547 = pneg %p154
        $region69: #{_model_plus_loss.1} parent=54 // pred_check_branch
          %1549 = sbr.rel (%p1547) target = $region71
        $region70: #{_model_plus_loss.1} parent=54 // pred_region
          %s1550 = smul.u32 8, %s22
          %s1551 = smul.u32 4, %s23
          %s1552 = smul.addr %s1550, 8
          %s1553 = sadd.s32 %s1551, %s1552
          %s1554 = smul.addr %s1553, 4
          %s1555 = scalar_lea.vmem %s4, %s1554
          // Predicated region
          $region72: #{_model_plus_loss.1} parent=70 // pred_check
            _
          $region73: #{_model_plus_loss.1} parent=70 // pred_check_branch
            %1557 = sbr.rel (0) target = $region75
          $region74: #{_model_plus_loss.1} parent=70 // pred_region
            // Predicated region
            $region76: #{_model_plus_loss.1} parent=74 // pred_check
              _
            $region77: #{_model_plus_loss.1} parent=74 // pred_check_branch
              %1559 = sbr.rel (0) target = $region79
            $region78: #{_model_plus_loss.1} parent=74 // pred_region
              loop: start=0, step=1, limit=1
              $region80: #{_model_plus_loss.1} parent=78 // loop_pre_header
                _
              $region81: #{_model_plus_loss.1} parent=78 // loop_header
                %s1561 = sphi 0, %s1565
                %p1562 = scmp.ge.s32.totalorder %s1561, 1
                %s1566 = sphi %s1536, %s1536
                %s1567 = sphi %s1555, %s1555
              $region82: #{_model_plus_loss.1} parent=78 // loop_header_branch
                %1564 = sbr.rel (%p1562) target = $region86
              $region83: #{_model_plus_loss.1} parent=78 // loop_body
                %v1568 = vld [vmem:[%s1566] sm:$0xff]
                %1569 = vst [vmem:[%s1567] sm:$0xff] %v1568
                %v1570 = vld [vmem:[%s1566 + $0x8] sm:$0xff]
                %1571 = vst [vmem:[%s1567 + $0x8] sm:$0xff] %v1570
                %v1572 = vld [vmem:[%s1566 + $0x10] sm:$0xff]
                %1573 = vst [vmem:[%s1567 + $0x20] sm:$0xff] %v1572
                %v1574 = vld [vmem:[%s1566 + $0x18] sm:$0xff]
                %1575 = vst [vmem:[%s1567 + $0x28] sm:$0xff] %v1574
                %v1576 = vld [vmem:[%s1566 + $0x20] sm:$0xff]
                %1577 = vst [vmem:[%s1567 + $0x40] sm:$0xff] %v1576
                %v1578 = vld [vmem:[%s1566 + $0x28] sm:$0xff]
                %1579 = vst [vmem:[%s1567 + $0x48] sm:$0xff] %v1578
                %v1580 = vld [vmem:[%s1566 + $0x30] sm:$0xff]
                %1581 = vst [vmem:[%s1567 + $0x60] sm:$0xff] %v1580
                %v1582 = vld [vmem:[%s1566 + $0x38] sm:$0xff]
                %1583 = vst [vmem:[%s1567 + $0x68] sm:$0xff] %v1582
                %v1584 = vld [vmem:[%s1566 + $0x40] sm:$0xff]
                %1585 = vst [vmem:[%s1567 + $0x80] sm:$0xff] %v1584
                %v1586 = vld [vmem:[%s1566 + $0x48] sm:$0xff]
                %1587 = vst [vmem:[%s1567 + $0x88] sm:$0xff] %v1586
                %v1588 = vld [vmem:[%s1566 + $0x50] sm:$0xff]
                %1589 = vst [vmem:[%s1567 + $0xa0] sm:$0xff] %v1588
                %v1590 = vld [vmem:[%s1566 + $0x58] sm:$0xff]
                %1591 = vst [vmem:[%s1567 + $0xa8] sm:$0xff] %v1590
                %v1592 = vld [vmem:[%s1566 + $0x60] sm:$0xff]
                %1593 = vst [vmem:[%s1567 + $0xc0] sm:$0xff] %v1592
                %v1594 = vld [vmem:[%s1566 + $0x68] sm:$0xff]
                %1595 = vst [vmem:[%s1567 + $0xc8] sm:$0xff] %v1594
                %v1596 = vld [vmem:[%s1566 + $0x70] sm:$0xff]
                %1597 = vst [vmem:[%s1567 + $0xe0] sm:$0xff] %v1596
                %v1598 = vld [vmem:[%s1566 + $0x78] sm:$0xff]
                %1599 = vst [vmem:[%s1567 + $0xe8] sm:$0xff] %v1598
              $region84: #{_model_plus_loss.1} parent=78 // loop_footer
                %s1565 = sadd.s32 1, %s1561
              $region85: #{_model_plus_loss.1} parent=78 // loop_footer_branch
                %1560 = sbr.rel target = $region81
              $region86: #{_model_plus_loss.1} parent=78 // loop_exit
                _
            $region79: #{_model_plus_loss.1} parent=74 // pred_fallthru
              _
            // Predicated region
            $region87: #{_model_plus_loss.1} parent=74 // pred_check
              _
            $region88: #{_model_plus_loss.1} parent=74 // pred_check_branch
              %1601 = sbr.rel target = $region90
            $region89: #{_model_plus_loss.1} parent=74 // pred_region
              _
            $region90: #{_model_plus_loss.1} parent=74 // pred_fallthru
              _
          $region75: #{_model_plus_loss.1} parent=70 // pred_fallthru
            _
          %1602 = vnop
        $region71: #{_model_plus_loss.1} parent=54 // pred_fallthru
          _
        // Predicated region
        $region91: #{_model_plus_loss.1} parent=54 // pred_check
          %p1603 = pneg %p180
        $region92: #{_model_plus_loss.1} parent=54 // pred_check_branch
          %1605 = sbr.rel (%p1603) target = $region94
        $region93: #{_model_plus_loss.1} parent=54 // pred_region
          %s1606 = smul.u32 8, %s22
        $region94: #{_model_plus_loss.1} parent=54 // pred_fallthru
          _
        // Predicated region
        $region95: #{_model_plus_loss.1} parent=54 // pred_check
          %p1607 = pneg %p206
        $region96: #{_model_plus_loss.1} parent=54 // pred_check_branch
          %1609 = sbr.rel (%p1607) target = $region98
        $region97: #{_model_plus_loss.1} parent=54 // pred_region
          %s1610 = smul.u32 8, %s22
        $region98: #{_model_plus_loss.1} parent=54 // pred_fallthru
          _
      $region55: #{_model_plus_loss.1} parent=5 // pred_fallthru
        _
      %p1611 = scmp.le.s32.totalorder 2, %s13
      // Predicated region
      $region99: #{_model_plus_loss.1} parent=5 // pred_check
        %p1612 = pneg %p1611
      $region100: #{_model_plus_loss.1} parent=5 // pred_check_branch
        %1614 = sbr.rel (%p1612) target = $region102
      $region101: #{_model_plus_loss.1} parent=5 // pred_region
        %s1615 = ssub.s32 %s13, 2
        // Predicated region
        $region103: #{_model_plus_loss.1} parent=101 // pred_check
          %p1616 = pneg %p160
        $region104: #{_model_plus_loss.1} parent=101 // pred_check_branch
          %1618 = sbr.rel (%p1616) target = $region106
        $region105: #{_model_plus_loss.1} parent=101 // pred_region
          %s1619 = sand.u32 %s145, 1
          %s1620 = sand.u32 %s145, 1
          %s1621 = smul.addr %s1620, 128
          %s1622 = scalar_lea.vmem [#allocation6], %s1621
        $region106: #{_model_plus_loss.1} parent=101 // pred_fallthru
          _
        // Predicated region
        $region107: #{_model_plus_loss.1} parent=101 // pred_check
          %p1623 = pneg %p186
        $region108: #{_model_plus_loss.1} parent=101 // pred_check_branch
          %1625 = sbr.rel (%p1623) target = $region110
        $region109: #{_model_plus_loss.1} parent=101 // pred_region
          %s1626 = smul.u32 8, %s24
          %p1627 = scmp.lt.s32.totalorder %s1626, 15
          %s1628 = scalar_select %p1627, %s1626, 15
          %s1629 = smul.addr %s1628, 8
          %s1630 = scalar_lea.vmem %s5, %s1629
        $region110: #{_model_plus_loss.1} parent=101 // pred_fallthru
          _
        // Predicated region
        $region111: #{_model_plus_loss.1} parent=101 // pred_check
          %p1631 = pneg %p212
        $region112: #{_model_plus_loss.1} parent=101 // pred_check_branch
          %1633 = sbr.rel (%p1631) target = $region114
        $region113: #{_model_plus_loss.1} parent=101 // pred_region
          %s1634 = smul.u32 8, %s24
          %p1635 = scmp.lt.s32.totalorder %s1634, 15
          %s1636 = scalar_select %p1635, %s1634, 15
          %s1637 = smul.addr %s1636, 8
          %s1638 = scalar_lea.vmem %s6, %s1637
        $region114: #{_model_plus_loss.1} parent=101 // pred_fallthru
          _
      $region102: #{_model_plus_loss.1} parent=5 // pred_fallthru
        _
    $region6: #{_model_plus_loss.1} parent=1 // loop_footer
      %s17 = sadd.s32 1, %s13
    $region7: #{_model_plus_loss.1} parent=1 // loop_footer_branch
      %12 = sbr.rel target = $region3
    $region8: #{_model_plus_loss.1} parent=1 // loop_exit
      _

</llo_original>
